<compile_context>
chip_gen: v5e
topology: v5e:2x2
jax: 0.10.0
libtpu: 0.0.40
codegen_flags: <defaults>
</compile_context>

<pallas_src>
import jax
import jax.numpy as jnp
from jax.experimental import pallas as pl
from jax.experimental.pallas import tpu as pltpu

NBIT = 8
NSPLIT = float(2 ** NBIT - 1)
BN_EPS = 1e-5


def _round_up(x, m):
    return (x + m - 1) // m * m


def _qdot(x, w_bf16, mn, qscale, dqscale, bias_col):
    """quantization() + re_quantization() of the reference (zero noise).

    x        : (K, cols) f32 activations, rows on lanes
    w_bf16   : (M, K) reservoir weight, bf16 (MXU operand)
    bias_col : (M, 1) = mn * sum(w, axis=1), precomputed in the wrapper
    q = floor((x - mn) * 255 / range)   (reference's uint8 cast; x >= mn)
      q is an exact integer in [0, 255] -> exactly representable in bf16.
    y = (W @ q) * range/255 + bias
    The clip guards bf16 rounding / padding; qscale/dqscale are 0 when the
    range is degenerate (the reference would NaN there).
    """
    q = jnp.clip(jnp.floor((x - mn) * qscale), 0.0, NSPLIT).astype(jnp.bfloat16)
    z = jnp.dot(w_bf16, q, preferred_element_type=jnp.float32)
    return z * dqscale + bias_col


# --------------------------------------------------------------------------
# Pass 1: per-tile partial min/max of the hidden activations h2 / h3 (needed
# for the second quantized layer).  Parallel grid, per-tile output blocks.
# --------------------------------------------------------------------------
def _stats_kernel(sc_ref, c2_ref, c3_ref, w1_ref, w3_ref, b1_ref, b3_ref,
                  out_ref):
    c2_mn, c2_qs, c2_dqs = sc_ref[0], sc_ref[1], sc_ref[2]
    c3_mn, c3_qs, c3_dqs = sc_ref[3], sc_ref[4], sc_ref[5]

    # padded rows are edge-replicates of the last valid row, so they cannot
    # perturb the global min/max -> no validity masking needed here.
    h2 = jnp.maximum(
        _qdot(c2_ref[...].astype(jnp.float32), w1_ref[...],
              c2_mn, c2_qs, c2_dqs, b1_ref[...]), 0.0)
    h3 = jnp.maximum(
        _qdot(c3_ref[...].astype(jnp.float32), w3_ref[...],
              c3_mn, c3_qs, c3_dqs, b3_ref[...]), 0.0)

    lane = jax.lax.broadcasted_iota(jnp.int32, (8, 128), 1)
    row = jnp.where(
        lane == 0, jnp.min(h2),
        jnp.where(lane == 1, jnp.max(h2),
                  jnp.where(lane == 2, jnp.min(h3), jnp.max(h3))))
    out_ref[...] = row[None]


# --------------------------------------------------------------------------
# Pass 2: fused two-body / three-body reservoir layers, gating, masked k-sum
# and per-tile BN partial moments.  Outputs (Fe, rows) slabs prior to BN.
# --------------------------------------------------------------------------
def _edge_update_kernel(sc_ref, c2_ref, c3_ref, mask_ref, valid_ref,
                        w1_ref, w2_ref, w3_ref, w4_ref,
                        b1_ref, b2_ref, b3_ref, b4_ref,
                        tb_ref, ts_ref, mom_ref):
    fe = tb_ref.shape[0]
    tile = c2_ref.shape[-1]
    nbr = mask_ref.shape[-1] // tile

    c2_mn, c2_qs, c2_dqs = sc_ref[0], sc_ref[1], sc_ref[2]
    c3_mn, c3_qs, c3_dqs = sc_ref[3], sc_ref[4], sc_ref[5]
    h2_mn, h2_qs, h2_dqs = sc_ref[6], sc_ref[7], sc_ref[8]
    h3_mn, h3_qs, h3_dqs = sc_ref[9], sc_ref[10], sc_ref[11]

    valid = valid_ref[...]                               # (1, tile), 1.0 on real rows

    # ---- two-body: quant-linear -> ReLU -> quant-linear -> sigmoid*tanh ----
    h2 = jnp.maximum(
        _qdot(c2_ref[...].astype(jnp.float32), w1_ref[...],
              c2_mn, c2_qs, c2_dqs, b1_ref[...]), 0.0)
    z2 = _qdot(h2, w2_ref[...], h2_mn, h2_qs, h2_dqs, b2_ref[...])
    # (Fe is a multiple of 8 in practice, keeping these slices sublane-aligned)
    tb = jax.nn.sigmoid(z2[:fe, :]) * jnp.tanh(z2[fe:, :]) * valid
    tb_ref[...] = tb

    # ---- three-body: one wide matmul over all Nbr slabs ----
    h3 = jnp.maximum(
        _qdot(c3_ref[...].astype(jnp.float32), w3_ref[...],
              c3_mn, c3_qs, c3_dqs, b3_ref[...]), 0.0)
    z3 = _qdot(h3, w4_ref[...], h3_mn, h3_qs, h3_dqs, b4_ref[...])
    g = jax.nn.sigmoid(z3[:fe, :]) * jnp.tanh(z3[fe:, :]) * mask_ref[...]

    # masked k-sum: Nbr lane-aligned static slices, VPU adds
    ts = g[:, 0:tile]
    for k in range(1, nbr):
        ts = ts + g[:, k * tile:(k + 1) * tile]
    ts_ref[...] = ts

    # ---- per-tile BN partial moments (padded columns are already zero) ----
    mom = jnp.concatenate(
        [jnp.sum(tb, axis=1, keepdims=True),
         jnp.sum(tb * tb, axis=1, keepdims=True),
         jnp.sum(ts, axis=1, keepdims=True),
         jnp.sum(ts * ts, axis=1, keepdims=True)], axis=1)      # (fe, 4)
    mom_ref[...] = mom[None]


def _qparams(mn, mx):
    rng = mx - mn
    ok = rng > 0
    safe = jnp.where(ok, rng, 1.0)
    return jnp.where(ok, NSPLIT / safe, 0.0), jnp.where(ok, safe / NSPLIT, 0.0)


def _vmem_budget_bytes():
    """75% of physical VMEM, capped to 96 MiB (v5e/v6e: 128 MiB, v7x: 64 MiB)."""
    try:
        cap = int(pltpu.get_tpu_info().vmem_capacity_bytes)
    except Exception:
        cap = 64 * 1024 * 1024
    return max(32 * 1024 * 1024, min(cap * 3 // 4, 96 * 1024 * 1024))


def edge_update(node_embedding, edge_embedding, nbr_idx, nbr_mask, weights):
    """JAX/Pallas equivalent of EdgeUpdate.forward (zero conductance noise)."""
    w1, w2, w3, w4 = (w.astype(jnp.float32) for w in weights)
    B, At, Nbr, Fe = edge_embedding.shape
    Fn = node_embedding.shape[-1]
    rows2 = B * At * Nbr
    F2 = 2 * Fn
    F3 = 3 * Fn + 2 * Fe
    M1 = w1.shape[0]                 # 8 * Fn
    M3 = w3.shape[0]                 # 6 * Fn + 4 * Fe

    # ---------- glue: gathers / broadcasts / concats (plain JAX) ----------
    j_flat = nbr_idx.reshape(B, At * Nbr, 1)

    node_j = jnp.take_along_axis(
        node_embedding, jnp.broadcast_to(j_flat, (B, At * Nbr, Fn)), axis=1
    ).reshape(B, At, Nbr, Fn)
    node_j = node_j * nbr_mask[..., None]
    node_i = jnp.broadcast_to(node_embedding[:, :, None, :], (B, At, Nbr, Fn))
    c2 = jnp.concatenate([node_i, node_j], axis=3)                     # (B,At,Nbr,2Fn)

    nbr_jk = jnp.take_along_axis(
        nbr_idx, jnp.broadcast_to(j_flat, (B, At * Nbr, Nbr)), axis=1)
    node_k = jnp.take_along_axis(
        node_embedding,
        jnp.broadcast_to(nbr_jk.reshape(B, At * Nbr * Nbr, 1),
                         (B, At * Nbr * Nbr, Fn)),
        axis=1).reshape(B, At, Nbr, Nbr, Fn)
    edge_jk = jnp.take_along_axis(
        edge_embedding,
        jnp.broadcast_to(j_flat[..., None], (B, At * Nbr, Nbr, Fe)),
        axis=1).reshape(B, At, Nbr, Nbr, Fe)
    edge_ij = jnp.broadcast_to(edge_embedding[:, :, :, None, :], (B, At, Nbr, Nbr, Fe))
    node_i_k = jnp.broadcast_to(node_i[:, :, :, None, :], (B, At, Nbr, Nbr, Fn))
    node_j_k = jnp.broadcast_to(node_j[:, :, :, None, :], (B, At, Nbr, Nbr, Fn))
    c3 = jnp.concatenate([node_i_k, node_j_k, node_k, edge_ij, edge_jk], axis=4)

    nbr_mask_expand = jnp.take_along_axis(
        nbr_mask, jnp.broadcast_to(j_flat, (B, At * Nbr, Nbr)), axis=1
    ).reshape(B, At, Nbr, Nbr)

    # global quantization statistics of the layer-1 inputs (f32, full tensors)
    c2_mn, c2_mx = jnp.min(c2), jnp.max(c2)
    c3_mn, c3_mx = jnp.min(c3), jnp.max(c3)
    c2_qs, c2_dqs = _qparams(c2_mn, c2_mx)
    c3_qs, c3_dqs = _qparams(c3_mn, c3_mx)

    # ---------- tile selection: >=2 tiles when possible, VMEM-aware ----------
    vmem_limit = _vmem_budget_bytes()
    rows_128 = _round_up(rows2, 128)
    tile = 128 if rows_128 < 256 else min(512, _round_up(rows_128 // 2, 128))

    def _tile_bytes(t):
        cols = Nbr * t
        stream = 2 * 2 * (F3 * cols) + 2 * 2 * F2 * t + 2 * 4 * (cols + 2 * t)
        outs = 2 * 2 * 4 * Fe * t
        interm = cols * (6 * F3 + 6 * M3 + 16 * Fe) + t * (6 * F2 + 6 * M1 + 16 * Fe)
        wts = 2 * 2 * (M1 * F2 + M3 * F3 + 2 * Fe * (M1 + M3))
        return stream + outs + interm + wts

    while tile > 128 and _tile_bytes(tile) > (2 * vmem_limit) // 3:
        tile -= 128

    rows2_pad = _round_up(rows2, tile)
    num_tiles = rows2_pad // tile
    pad = rows2_pad - rows2

    # ---------- layout: rows -> lanes, bf16 BEFORE the transpose ----------
    # Padded rows are edge-replicates of the last valid row so that the stats
    # pass needs no validity masking; the neighbor mask is zero-padded so the
    # k-sum and BN partial sums see exact zeros on padded columns.
    c2_bf = c2.reshape(rows2, F2).astype(jnp.bfloat16)
    c2_t = jnp.pad(c2_bf, ((0, pad), (0, 0)), mode="edge").T          # (F2, rows2_pad)

    c3_bf = c3.reshape(rows2, Nbr, F3).astype(jnp.bfloat16)
    c3_w = jnp.pad(c3_bf, ((0, pad), (0, 0), (0, 0)), mode="edge")
    c3_w = c3_w.reshape(num_tiles, tile, Nbr, F3)
    c3_w = jnp.transpose(c3_w, (3, 0, 2, 1)).reshape(F3, num_tiles * Nbr * tile)

    mask_w = jnp.pad(nbr_mask_expand.reshape(rows2, Nbr).astype(jnp.float32),
                     ((0, pad), (0, 0)))
    mask_w = mask_w.reshape(num_tiles, tile, Nbr)
    mask_w = jnp.transpose(mask_w, (0, 2, 1)).reshape(1, num_tiles * Nbr * tile)

    valid_t = (jnp.arange(rows2_pad) < rows2).astype(jnp.float32).reshape(1, rows2_pad)

    # bf16 MXU weights + precomputed dequant biases (from the f32 weights)
    w1_bf, w2_bf = w1.astype(jnp.bfloat16), w2.astype(jnp.bfloat16)
    w3_bf, w4_bf = w3.astype(jnp.bfloat16), w4.astype(jnp.bfloat16)
    w1_sum = jnp.sum(w1, axis=1, keepdims=True)
    w2_sum = jnp.sum(w2, axis=1, keepdims=True)
    w3_sum = jnp.sum(w3, axis=1, keepdims=True)
    w4_sum = jnp.sum(w4, axis=1, keepdims=True)
    b1 = c2_mn * w1_sum
    b3 = c3_mn * w3_sum

    smem_spec = pl.BlockSpec(memory_space=pltpu.MemorySpace.SMEM)
    c2_spec = pl.BlockSpec((F2, tile), lambda i: (0, i))
    c3_spec = pl.BlockSpec((F3, Nbr * tile), lambda i: (0, i))
    mask_spec = pl.BlockSpec((1, Nbr * tile), lambda i: (0, i))
    valid_spec = pl.BlockSpec((1, tile), lambda i: (0, i))

    def full(shape):
        return pl.BlockSpec(shape, lambda i: (0,) * len(shape))

    cparams = pltpu.CompilerParams(dimension_semantics=("parallel",),
                                   vmem_limit_bytes=vmem_limit)

    # ---------- pass 1: per-tile partial min/max of h2 / h3 ----------
    sc6 = jnp.stack([c2_mn, c2_qs, c2_dqs, c3_mn, c3_qs, c3_dqs]).astype(jnp.float32)
    stats = pl.pallas_call(
        _stats_kernel,
        grid=(num_tiles,),
        in_specs=[smem_spec, c2_spec, c3_spec,
                  full(w1_bf.shape), full(w3_bf.shape), full(b1.shape), full(b3.shape)],
        out_specs=pl.BlockSpec((1, 8, 128), lambda i: (i, 0, 0)),
        out_shape=jax.ShapeDtypeStruct((num_tiles, 8, 128), jnp.float32),
        compiler_params=cparams,
    )(sc6, c2_t, c3_w, w1_bf, w3_bf, b1, b3)

    h2_mn, h2_mx = jnp.min(stats[:, 0, 0]), jnp.max(stats[:, 0, 1])
    h3_mn, h3_mx = jnp.min(stats[:, 0, 2]), jnp.max(stats[:, 0, 3])
    h2_qs, h2_dqs = _qparams(h2_mn, h2_mx)
    h3_qs, h3_dqs = _qparams(h3_mn, h3_mx)
    b2 = h2_mn * w2_sum
    b4 = h3_mn * w4_sum
    sc12 = jnp.stack([c2_mn, c2_qs, c2_dqs, c3_mn, c3_qs, c3_dqs,
                      h2_mn, h2_qs, h2_dqs, h3_mn, h3_qs, h3_dqs]).astype(jnp.float32)

    # ---------- pass 2: reservoir layers + gating + masked k-sum + moments ----------
    tb_t, ts_t, mom = pl.pallas_call(
        _edge_update_kernel,
        grid=(num_tiles,),
        in_specs=[smem_spec, c2_spec, c3_spec, mask_spec, valid_spec,
                  full(w1_bf.shape), full(w2_bf.shape), full(w3_bf.shape), full(w4_bf.shape),
                  full(b1.shape), full(b2.shape), full(b3.shape), full(b4.shape)],
        out_specs=(pl.BlockSpec((Fe, tile), lambda i: (0, i)),
                   pl.BlockSpec((Fe, tile), lambda i: (0, i)),
                   pl.BlockSpec((1, Fe, 4), lambda i: (i, 0, 0))),
        out_shape=(jax.ShapeDtypeStruct((Fe, rows2_pad), jnp.float32),
                   jax.ShapeDtypeStruct((Fe, rows2_pad), jnp.float32),
                   jax.ShapeDtypeStruct((num_tiles, Fe, 4), jnp.float32)),
        compiler_params=cparams,
    )(sc12, c2_t, c3_w, mask_w, valid_t,
      w1_bf, w2_bf, w3_bf, w4_bf, b1, b2, b3, b4)

    # ---------- batch-norm moments from the per-tile partial sums ----------
    # (training mode, gamma=1 / beta=0, biased variance)
    msum = jnp.sum(mom, axis=0)                             # (Fe, 4)
    n = jnp.float32(rows2)
    tb_mean = msum[:, 0] / n
    tb_var = jnp.maximum(msum[:, 1] / n - tb_mean * tb_mean, 0.0)
    ts_mean = msum[:, 2] / n
    ts_var = jnp.maximum(msum[:, 3] / n - ts_mean * ts_mean, 0.0)
    tb_scale = jax.lax.rsqrt(tb_var + BN_EPS)
    ts_scale = jax.lax.rsqrt(ts_var + BN_EPS)

    # ---------- finalize (BN + residual + ReLU) fused into XLA + final transpose ----------
    tb = (tb_t[:, :rows2] - tb_mean[:, None]) * tb_scale[:, None]
    ts = (ts_t[:, :rows2] - ts_mean[:, None]) * ts_scale[:, None]
    out = jnp.maximum(
        edge_embedding
        + tb.T.reshape(B, At, Nbr, Fe)
        + ts.T.reshape(B, At, Nbr, Fe), 0.0)
    return out


if __name__ == "__main__":
    B, At, Nbr = 2, 4, 3
    Fn, Fe = 8, 8  # n_node_feature, n_edge_feature

    key = jax.random.PRNGKey(0)
    k_node, k_edge, k_idx, k_mask, k1, k2, k3, k4 = jax.random.split(key, 8)

    node_embedding = jax.random.normal(k_node, (B, At, Fn), dtype=jnp.float32)
    edge_embedding = jax.random.normal(k_edge, (B, At, Nbr, Fe), dtype=jnp.float32)
    nbr_idx = jax.random.randint(k_idx, (B, At, Nbr), 0, At, dtype=jnp.int32)
    nbr_mask = (jax.random.uniform(k_mask, (B, At, Nbr)) > 0.2).astype(jnp.float32)

    # Deterministic "conductance" weights (reservoir_Linear shapes from __init__).
    w1 = 0.1 * jax.random.normal(k1, (8 * Fn, 2 * Fn), dtype=jnp.float32)
    w2 = 0.1 * jax.random.normal(k2, (2 * Fe, 8 * Fn), dtype=jnp.float32)
    w3 = 0.1 * jax.random.normal(k3, (6 * Fn + 4 * Fe, 3 * Fn + 2 * Fe), dtype=jnp.float32)
    w4 = 0.1 * jax.random.normal(k4, (2 * Fe, 6 * Fn + 4 * Fe), dtype=jnp.float32)

    out = jax.jit(edge_update)(node_embedding, edge_embedding, nbr_idx, nbr_mask,
                               (w1, w2, w3, w4))
    out = jax.block_until_ready(out)
    assert out.shape == (B, At, Nbr, Fe)
    assert bool(jnp.all(jnp.isfinite(out)))
    print("KERNEL_OK")
</pallas_src>

<mosaic_0001>
module attributes {stable_mosaic.version = 11 : i64} {
  func.func @_stats_kernel(%arg0: i32, %arg1: memref<6xf32, #tpu.memory_space<smem>>, %arg2: memref<16x128xbf16, #tpu.memory_space<vmem>>, %arg3: memref<40x384xbf16, #tpu.memory_space<vmem>>, %arg4: memref<64x16xbf16, #tpu.memory_space<vmem>>, %arg5: memref<80x40xbf16, #tpu.memory_space<vmem>>, %arg6: memref<64x1xf32, #tpu.memory_space<vmem>>, %arg7: memref<80x1xf32, #tpu.memory_space<vmem>>, %arg8: memref<1x8x128xf32, #tpu.memory_space<vmem>>) attributes {dimension_semantics = [#tpu.dimension_semantics<parallel>], iteration_bounds = array<i64: 1>, scalar_prefetch = 0 : i64, scratch_operands = 0 : i64, tpu.core_type = #tpu.core_type<tc>, window_params = [{transform_indices = @transform_0, window_bounds = array<i64: 6>}, {transform_indices = @transform_1, window_bounds = array<i64: 16, 128>}, {transform_indices = @transform_2, window_bounds = array<i64: 40, 384>}, {pipeline_mode = #tpu.pipeline_mode<synchronous>, transform_indices = @transform_3, window_bounds = array<i64: 64, 16>}, {pipeline_mode = #tpu.pipeline_mode<synchronous>, transform_indices = @transform_4, window_bounds = array<i64: 80, 40>}, {pipeline_mode = #tpu.pipeline_mode<synchronous>, transform_indices = @transform_5, window_bounds = array<i64: 64, 1>}, {pipeline_mode = #tpu.pipeline_mode<synchronous>, transform_indices = @transform_6, window_bounds = array<i64: 80, 1>}, {transform_indices = @transform_7, window_bounds = array<i64: 1, 8, 128>}]} {
    %c0 = arith.constant 0 : index
    %0 = memref.load %arg1[%c0] : memref<6xf32, #tpu.memory_space<smem>>
    %c1 = arith.constant 1 : index
    %1 = memref.load %arg1[%c1] : memref<6xf32, #tpu.memory_space<smem>>
    %c2 = arith.constant 2 : index
    %2 = memref.load %arg1[%c2] : memref<6xf32, #tpu.memory_space<smem>>
    %c3 = arith.constant 3 : index
    %3 = memref.load %arg1[%c3] : memref<6xf32, #tpu.memory_space<smem>>
    %c4 = arith.constant 4 : index
    %4 = memref.load %arg1[%c4] : memref<6xf32, #tpu.memory_space<smem>>
    %c5 = arith.constant 5 : index
    %5 = memref.load %arg1[%c5] : memref<6xf32, #tpu.memory_space<smem>>
    %c0_0 = arith.constant 0 : index
    %c0_1 = arith.constant 0 : index
    %6 = vector.load %arg2[%c0_0, %c0_1] : memref<16x128xbf16, #tpu.memory_space<vmem>>, vector<16x128xbf16>
    %7 = arith.extf %6 : vector<16x128xbf16> to vector<16x128xf32>
    %c0_2 = arith.constant 0 : index
    %c0_3 = arith.constant 0 : index
    %8 = vector.load %arg4[%c0_2, %c0_3] : memref<64x16xbf16, #tpu.memory_space<vmem>>, vector<64x16xbf16>
    %c0_4 = arith.constant 0 : index
    %c0_5 = arith.constant 0 : index
    %9 = vector.load %arg6[%c0_4, %c0_5] : memref<64x1xf32, #tpu.memory_space<vmem>>, vector<64x1xf32>
    %10 = vector.broadcast %0 : f32 to vector<16x128xf32>
    %11 = arith.subf %7, %10 : vector<16x128xf32>
    %12 = vector.broadcast %1 : f32 to vector<16x128xf32>
    %13 = arith.mulf %11, %12 : vector<16x128xf32>
    %14 = math.floor %13 : vector<16x128xf32>
    %cst = arith.constant 0.000000e+00 : f32
    %cst_6 = arith.constant 2.550000e+02 : f32
    %15 = vector.broadcast %cst : f32 to vector<16x128xf32>
    %16 = arith.maximumf %15, %14 : vector<16x128xf32>
    %17 = vector.broadcast %cst_6 : f32 to vector<16x128xf32>
    %18 = arith.minimumf %17, %16 : vector<16x128xf32>
    %19 = arith.truncf %18 : vector<16x128xf32> to vector<16x128xbf16>
    %cst_7 = arith.constant dense<0.000000e+00> : vector<64x128xf32>
    %20 = tpu.matmul %8, %19, %cst_7 {dimension_numbers = #tpu.dot_dimension_numbers<[1], [0], [0], [1], [0, 0, 1, 1], [], []>} : vector<64x16xbf16>, vector<16x128xbf16>, vector<64x128xf32> -> vector<64x128xf32>
    %21 = vector.broadcast %2 : f32 to vector<64x128xf32>
    %22 = arith.mulf %20, %21 : vector<64x128xf32>
    %23 = vector.broadcast %9 : vector<64x1xf32> to vector<64x128xf32>
    %24 = arith.addf %22, %23 : vector<64x128xf32>
    %cst_8 = arith.constant 0.000000e+00 : f32
    %25 = vector.broadcast %cst_8 : f32 to vector<64x128xf32>
    %26 = arith.maximumf %24, %25 : vector<64x128xf32>
    %c0_9 = arith.constant 0 : index
    %c0_10 = arith.constant 0 : index
    %27 = vector.load %arg3[%c0_9, %c0_10] : memref<40x384xbf16, #tpu.memory_space<vmem>>, vector<40x384xbf16>
    %28 = arith.extf %27 : vector<40x384xbf16> to vector<40x384xf32>
    %c0_11 = arith.constant 0 : index
    %c0_12 = arith.constant 0 : index
    %29 = vector.load %arg5[%c0_11, %c0_12] : memref<80x40xbf16, #tpu.memory_space<vmem>>, vector<80x40xbf16>
    %c0_13 = arith.constant 0 : index
    %c0_14 = arith.constant 0 : index
    %30 = vector.load %arg7[%c0_13, %c0_14] : memref<80x1xf32, #tpu.memory_space<vmem>>, vector<80x1xf32>
    %31 = vector.broadcast %3 : f32 to vector<40x384xf32>
    %32 = arith.subf %28, %31 : vector<40x384xf32>
    %33 = vector.broadcast %4 : f32 to vector<40x384xf32>
    %34 = arith.mulf %32, %33 : vector<40x384xf32>
    %35 = math.floor %34 : vector<40x384xf32>
    %cst_15 = arith.constant 0.000000e+00 : f32
    %cst_16 = arith.constant 2.550000e+02 : f32
    %36 = vector.broadcast %cst_15 : f32 to vector<40x384xf32>
    %37 = arith.maximumf %36, %35 : vector<40x384xf32>
    %38 = vector.broadcast %cst_16 : f32 to vector<40x384xf32>
    %39 = arith.minimumf %38, %37 : vector<40x384xf32>
    %40 = arith.truncf %39 : vector<40x384xf32> to vector<40x384xbf16>
    %cst_17 = arith.constant dense<0.000000e+00> : vector<80x384xf32>
    %41 = tpu.matmul %29, %40, %cst_17 {dimension_numbers = #tpu.dot_dimension_numbers<[1], [0], [0], [1], [0, 0, 1, 1], [], []>} : vector<80x40xbf16>, vector<40x384xbf16>, vector<80x384xf32> -> vector<80x384xf32>
    %42 = vector.broadcast %5 : f32 to vector<80x384xf32>
    %43 = arith.mulf %41, %42 : vector<80x384xf32>
    %44 = vector.broadcast %30 : vector<80x1xf32> to vector<80x384xf32>
    %45 = arith.addf %43, %44 : vector<80x384xf32>
    %cst_18 = arith.constant 0.000000e+00 : f32
    %46 = vector.broadcast %cst_18 : f32 to vector<80x384xf32>
    %47 = arith.maximumf %45, %46 : vector<80x384xf32>
    %48 = tpu.iota {dimensions = array<i32: 1>} : vector<8x128xi32>
    %c0_i32 = arith.constant 0 : i32
    %49 = vector.broadcast %c0_i32 : i32 to vector<8x128xi32>
    %50 = arith.cmpi eq, %48, %49 : vector<8x128xi32>
    %51 = vector.shape_cast %26 : vector<64x128xf32> to vector<1x64x128xf32>
    %cst_19 = arith.constant dense<0x7F800000> : vector<1xf32>
    %52 = vector.multi_reduction <minimumf>, %51, %cst_19 [1, 2] : vector<1x64x128xf32> to vector<1xf32>
    %53 = vector.shape_cast %52 : vector<1xf32> to vector<1x1x1xf32>
    %54 = vector.extract %53[0, 0, 0] : f32 from vector<1x1x1xf32>
    %c1_i32 = arith.constant 1 : i32
    %55 = vector.broadcast %c1_i32 : i32 to vector<8x128xi32>
    %56 = arith.cmpi eq, %48, %55 : vector<8x128xi32>
    %57 = vector.shape_cast %26 : vector<64x128xf32> to vector<1x64x128xf32>
    %cst_20 = arith.constant dense<0xFF800000> : vector<1xf32>
    %58 = vector.multi_reduction <maximumf>, %57, %cst_20 [1, 2] : vector<1x64x128xf32> to vector<1xf32>
    %59 = vector.shape_cast %58 : vector<1xf32> to vector<1x1x1xf32>
    %60 = vector.extract %59[0, 0, 0] : f32 from vector<1x1x1xf32>
    %c2_i32 = arith.constant 2 : i32
    %61 = vector.broadcast %c2_i32 : i32 to vector<8x128xi32>
    %62 = arith.cmpi eq, %48, %61 : vector<8x128xi32>
    %63 = vector.shape_cast %47 : vector<80x384xf32> to vector<1x80x384xf32>
    %cst_21 = arith.constant dense<0x7F800000> : vector<1xf32>
    %64 = vector.multi_reduction <minimumf>, %63, %cst_21 [1, 2] : vector<1x80x384xf32> to vector<1xf32>
    %65 = vector.shape_cast %64 : vector<1xf32> to vector<1x1x1xf32>
    %66 = vector.extract %65[0, 0, 0] : f32 from vector<1x1x1xf32>
    %67 = vector.shape_cast %47 : vector<80x384xf32> to vector<1x80x384xf32>
    %cst_22 = arith.constant dense<0xFF800000> : vector<1xf32>
    %68 = vector.multi_reduction <maximumf>, %67, %cst_22 [1, 2] : vector<1x80x384xf32> to vector<1xf32>
    %69 = vector.shape_cast %68 : vector<1xf32> to vector<1x1x1xf32>
    %70 = vector.extract %69[0, 0, 0] : f32 from vector<1x1x1xf32>
    %71 = vector.broadcast %66 : f32 to vector<8x128xf32>
    %72 = vector.broadcast %70 : f32 to vector<8x128xf32>
    %73 = arith.select %62, %71, %72 : vector<8x128xi1>, vector<8x128xf32>
    %74 = vector.broadcast %60 : f32 to vector<8x128xf32>
    %75 = arith.select %56, %74, %73 : vector<8x128xi1>, vector<8x128xf32>
    %76 = vector.broadcast %54 : f32 to vector<8x128xf32>
    %77 = arith.select %50, %76, %75 : vector<8x128xi1>, vector<8x128xf32>
    %78 = vector.shape_cast %77 : vector<8x128xf32> to vector<1x8x128xf32>
    %c0_23 = arith.constant 0 : index
    %c0_24 = arith.constant 0 : index
    %c0_25 = arith.constant 0 : index
    %79 = vector.load %arg8[%c0_23, %c0_24, %c0_25] : memref<1x8x128xf32, #tpu.memory_space<vmem>>, vector<1x8x128xf32>
    tpu.vector_store %arg8[%c0_23, %c0_24, %c0_25], %78 {strides = array<i32>} : memref<1x8x128xf32, #tpu.memory_space<vmem>>, vector<1x8x128xf32>,
    return
  }
  func.func @transform_0(%arg0: i32) -> i32 {
    %c0_i32 = arith.constant 0 : i32
    %c0_i32_0 = arith.constant 0 : i32
    return %c0_i32 : i32
  }
  func.func @transform_1(%arg0: i32) -> (i32, i32) {
    %c0_i32 = arith.constant 0 : i32
    %c0_i32_0 = arith.constant 0 : i32
    return %c0_i32, %arg0 : i32, i32
  }
  func.func @transform_2(%arg0: i32) -> (i32, i32) {
    %c0_i32 = arith.constant 0 : i32
    %c0_i32_0 = arith.constant 0 : i32
    return %c0_i32, %arg0 : i32, i32
  }
  func.func @transform_3(%arg0: i32) -> (i32, i32) {
    %c0_i32 = arith.constant 0 : i32
    %c0_i32_0 = arith.constant 0 : i32
    %c0_i32_1 = arith.constant 0 : i32
    return %c0_i32, %c0_i32_0 : i32, i32
  }
  func.func @transform_4(%arg0: i32) -> (i32, i32) {
    %c0_i32 = arith.constant 0 : i32
    %c0_i32_0 = arith.constant 0 : i32
    %c0_i32_1 = arith.constant 0 : i32
    return %c0_i32, %c0_i32_0 : i32, i32
  }
  func.func @transform_5(%arg0: i32) -> (i32, i32) {
    %c0_i32 = arith.constant 0 : i32
    %c0_i32_0 = arith.constant 0 : i32
    %c0_i32_1 = arith.constant 0 : i32
    return %c0_i32, %c0_i32_0 : i32, i32
  }
  func.func @transform_6(%arg0: i32) -> (i32, i32) {
    %c0_i32 = arith.constant 0 : i32
    %c0_i32_0 = arith.constant 0 : i32
    %c0_i32_1 = arith.constant 0 : i32
    return %c0_i32, %c0_i32_0 : i32, i32
  }
  func.func @transform_7(%arg0: i32) -> (i32, i32, i32) {
    %c0_i32 = arith.constant 0 : i32
    %c0_i32_0 = arith.constant 0 : i32
    %c0_i32_1 = arith.constant 0 : i32
    return %arg0, %c0_i32, %c0_i32_0 : i32, i32, i32
  }
}

module attributes {stable_mosaic.version = 11 : i64} {
  func.func @_edge_update_kernel(%arg0: i32, %arg1: memref<12xf32, #tpu.memory_space<smem>>, %arg2: memref<16x128xbf16, #tpu.memory_space<vmem>>, %arg3: memref<40x384xbf16, #tpu.memory_space<vmem>>, %arg4: memref<1x384xf32, #tpu.memory_space<vmem>>, %arg5: memref<1x128xf32, #tpu.memory_space<vmem>>, %arg6: memref<64x16xbf16, #tpu.memory_space<vmem>>, %arg7: memref<16x64xbf16, #tpu.memory_space<vmem>>, %arg8: memref<80x40xbf16, #tpu.memory_space<vmem>>, %arg9: memref<16x80xbf16, #tpu.memory_space<vmem>>, %arg10: memref<64x1xf32, #tpu.memory_space<vmem>>, %arg11: memref<16x1xf32, #tpu.memory_space<vmem>>, %arg12: memref<80x1xf32, #tpu.memory_space<vmem>>, %arg13: memref<16x1xf32, #tpu.memory_space<vmem>>, %arg14: memref<8x128xf32, #tpu.memory_space<vmem>>, %arg15: memref<8x128xf32, #tpu.memory_space<vmem>>, %arg16: memref<1x8x4xf32, #tpu.memory_space<vmem>>) attributes {dimension_semantics = [#tpu.dimension_semantics<parallel>], iteration_bounds = array<i64: 1>, scalar_prefetch = 0 : i64, scratch_operands = 0 : i64, tpu.core_type = #tpu.core_type<tc>, window_params = [{transform_indices = @transform_0, window_bounds = array<i64: 12>}, {transform_indices = @transform_1, window_bounds = array<i64: 16, 128>}, {transform_indices = @transform_2, window_bounds = array<i64: 40, 384>}, {transform_indices = @transform_3, window_bounds = array<i64: 1, 384>}, {transform_indices = @transform_4, window_bounds = array<i64: 1, 128>}, {pipeline_mode = #tpu.pipeline_mode<synchronous>, transform_indices = @transform_5, window_bounds = array<i64: 64, 16>}, {pipeline_mode = #tpu.pipeline_mode<synchronous>, transform_indices = @transform_6, window_bounds = array<i64: 16, 64>}, {pipeline_mode = #tpu.pipeline_mode<synchronous>, transform_indices = @transform_7, window_bounds = array<i64: 80, 40>}, {pipeline_mode = #tpu.pipeline_mode<synchronous>, transform_indices = @transform_8, window_bounds = array<i64: 16, 80>}, {pipeline_mode = #tpu.pipeline_mode<synchronous>, transform_indices = @transform_9, window_bounds = array<i64: 64, 1>}, {pipeline_mode = #tpu.pipeline_mode<synchronous>, transform_indices = @transform_10, window_bounds = array<i64: 16, 1>}, {pipeline_mode = #tpu.pipeline_mode<synchronous>, transform_indices = @transform_11, window_bounds = array<i64: 80, 1>}, {pipeline_mode = #tpu.pipeline_mode<synchronous>, transform_indices = @transform_12, window_bounds = array<i64: 16, 1>}, {transform_indices = @transform_13, window_bounds = array<i64: 8, 128>}, {transform_indices = @transform_14, window_bounds = array<i64: 8, 128>}, {transform_indices = @transform_15, window_bounds = array<i64: 1, 8, 4>}]} {
    %c0 = arith.constant 0 : index
    %0 = memref.load %arg1[%c0] : memref<12xf32, #tpu.memory_space<smem>>
    %c1 = arith.constant 1 : index
    %1 = memref.load %arg1[%c1] : memref<12xf32, #tpu.memory_space<smem>>
    %c2 = arith.constant 2 : index
    %2 = memref.load %arg1[%c2] : memref<12xf32, #tpu.memory_space<smem>>
    %c3 = arith.constant 3 : index
    %3 = memref.load %arg1[%c3] : memref<12xf32, #tpu.memory_space<smem>>
    %c4 = arith.constant 4 : index
    %4 = memref.load %arg1[%c4] : memref<12xf32, #tpu.memory_space<smem>>
    %c5 = arith.constant 5 : index
    %5 = memref.load %arg1[%c5] : memref<12xf32, #tpu.memory_space<smem>>
    %c6 = arith.constant 6 : index
    %6 = memref.load %arg1[%c6] : memref<12xf32, #tpu.memory_space<smem>>
    %c7 = arith.constant 7 : index
    %7 = memref.load %arg1[%c7] : memref<12xf32, #tpu.memory_space<smem>>
    %c8 = arith.constant 8 : index
    %8 = memref.load %arg1[%c8] : memref<12xf32, #tpu.memory_space<smem>>
    %c9 = arith.constant 9 : index
    %9 = memref.load %arg1[%c9] : memref<12xf32, #tpu.memory_space<smem>>
    %c10 = arith.constant 10 : index
    %10 = memref.load %arg1[%c10] : memref<12xf32, #tpu.memory_space<smem>>
    %c11 = arith.constant 11 : index
    %11 = memref.load %arg1[%c11] : memref<12xf32, #tpu.memory_space<smem>>
    %c0_0 = arith.constant 0 : index
    %c0_1 = arith.constant 0 : index
    %12 = vector.load %arg5[%c0_0, %c0_1] : memref<1x128xf32, #tpu.memory_space<vmem>>, vector<1x128xf32>
    %c0_2 = arith.constant 0 : index
    %c0_3 = arith.constant 0 : index
    %13 = vector.load %arg2[%c0_2, %c0_3] : memref<16x128xbf16, #tpu.memory_space<vmem>>, vector<16x128xbf16>
    %14 = arith.extf %13 : vector<16x128xbf16> to vector<16x128xf32>
    %c0_4 = arith.constant 0 : index
    %c0_5 = arith.constant 0 : index
    %15 = vector.load %arg6[%c0_4, %c0_5] : memref<64x16xbf16, #tpu.memory_space<vmem>>, vector<64x16xbf16>
    %c0_6 = arith.constant 0 : index
    %c0_7 = arith.constant 0 : index
    %16 = vector.load %arg10[%c0_6, %c0_7] : memref<64x1xf32, #tpu.memory_space<vmem>>, vector<64x1xf32>
    %17 = vector.broadcast %0 : f32 to vector<16x128xf32>
    %18 = arith.subf %14, %17 : vector<16x128xf32>
    %19 = vector.broadcast %1 : f32 to vector<16x128xf32>
    %20 = arith.mulf %18, %19 : vector<16x128xf32>
    %21 = math.floor %20 : vector<16x128xf32>
    %cst = arith.constant 0.000000e+00 : f32
    %cst_8 = arith.constant 2.550000e+02 : f32
    %22 = vector.broadcast %cst : f32 to vector<16x128xf32>
    %23 = arith.maximumf %22, %21 : vector<16x128xf32>
    %24 = vector.broadcast %cst_8 : f32 to vector<16x128xf32>
    %25 = arith.minimumf %24, %23 : vector<16x128xf32>
    %26 = arith.truncf %25 : vector<16x128xf32> to vector<16x128xbf16>
    %cst_9 = arith.constant dense<0.000000e+00> : vector<64x128xf32>
    %27 = tpu.matmul %15, %26, %cst_9 {dimension_numbers = #tpu.dot_dimension_numbers<[1], [0], [0], [1], [0, 0, 1, 1], [], []>} : vector<64x16xbf16>, vector<16x128xbf16>, vector<64x128xf32> -> vector<64x128xf32>
    %28 = vector.broadcast %2 : f32 to vector<64x128xf32>
    %29 = arith.mulf %27, %28 : vector<64x128xf32>
    %30 = vector.broadcast %16 : vector<64x1xf32> to vector<64x128xf32>
    %31 = arith.addf %29, %30 : vector<64x128xf32>
    %cst_10 = arith.constant 0.000000e+00 : f32
    %32 = vector.broadcast %cst_10 : f32 to vector<64x128xf32>
    %33 = arith.maximumf %31, %32 : vector<64x128xf32>
    %c0_11 = arith.constant 0 : index
    %c0_12 = arith.constant 0 : index
    %34 = vector.load %arg7[%c0_11, %c0_12] : memref<16x64xbf16, #tpu.memory_space<vmem>>, vector<16x64xbf16>
    %c0_13 = arith.constant 0 : index
    %c0_14 = arith.constant 0 : index
    %35 = vector.load %arg11[%c0_13, %c0_14] : memref<16x1xf32, #tpu.memory_space<vmem>>, vector<16x1xf32>
    %36 = vector.broadcast %6 : f32 to vector<64x128xf32>
    %37 = arith.subf %33, %36 : vector<64x128xf32>
    %38 = vector.broadcast %7 : f32 to vector<64x128xf32>
    %39 = arith.mulf %37, %38 : vector<64x128xf32>
    %40 = math.floor %39 : vector<64x128xf32>
    %cst_15 = arith.constant 0.000000e+00 : f32
    %cst_16 = arith.constant 2.550000e+02 : f32
    %41 = vector.broadcast %cst_15 : f32 to vector<64x128xf32>
    %42 = arith.maximumf %41, %40 : vector<64x128xf32>
    %43 = vector.broadcast %cst_16 : f32 to vector<64x128xf32>
    %44 = arith.minimumf %43, %42 : vector<64x128xf32>
    %45 = arith.truncf %44 : vector<64x128xf32> to vector<64x128xbf16>
    %cst_17 = arith.constant dense<0.000000e+00> : vector<16x128xf32>
    %46 = tpu.matmul %34, %45, %cst_17 {dimension_numbers = #tpu.dot_dimension_numbers<[1], [0], [0], [1], [0, 0, 1, 1], [], []>} : vector<16x64xbf16>, vector<64x128xbf16>, vector<16x128xf32> -> vector<16x128xf32>
    %47 = vector.broadcast %8 : f32 to vector<16x128xf32>
    %48 = arith.mulf %46, %47 : vector<16x128xf32>
    %49 = vector.broadcast %35 : vector<16x1xf32> to vector<16x128xf32>
    %50 = arith.addf %48, %49 : vector<16x128xf32>
    %51 = vector.extract_strided_slice %50 {offsets = [0, 0], sizes = [8, 128], strides = [1, 1]} : vector<16x128xf32> to vector<8x128xf32>
    %52 = arith.negf %51 : vector<8x128xf32>
    %53 = math.exp %52 : vector<8x128xf32>
    %cst_18 = arith.constant 1.000000e+00 : f32
    %54 = vector.broadcast %cst_18 : f32 to vector<8x128xf32>
    %55 = arith.addf %54, %53 : vector<8x128xf32>
    %56 = arith.divf %54, %55 : vector<8x128xf32>
    %57 = vector.extract_strided_slice %50 {offsets = [8, 0], sizes = [8, 128], strides = [1, 1]} : vector<16x128xf32> to vector<8x128xf32>
    %58 = math.tanh %57 : vector<8x128xf32>
    %59 = arith.mulf %56, %58 : vector<8x128xf32>
    %60 = vector.broadcast %12 : vector<1x128xf32> to vector<8x128xf32>
    %61 = arith.mulf %59, %60 : vector<8x128xf32>
    %c0_19 = arith.constant 0 : index
    %c0_20 = arith.constant 0 : index
    %62 = vector.load %arg14[%c0_19, %c0_20] : memref<8x128xf32, #tpu.memory_space<vmem>>, vector<8x128xf32>
    tpu.vector_store %arg14[%c0_19, %c0_20], %61 {strides = array<i32>} : memref<8x128xf32, #tpu.memory_space<vmem>>, vector<8x128xf32>,
    %c0_21 = arith.constant 0 : index
    %c0_22 = arith.constant 0 : index
    %63 = vector.load %arg3[%c0_21, %c0_22] : memref<40x384xbf16, #tpu.memory_space<vmem>>, vector<40x384xbf16>
    %64 = arith.extf %63 : vector<40x384xbf16> to vector<40x384xf32>
    %c0_23 = arith.constant 0 : index
    %c0_24 = arith.constant 0 : index
    %65 = vector.load %arg8[%c0_23, %c0_24] : memref<80x40xbf16, #tpu.memory_space<vmem>>, vector<80x40xbf16>
    %c0_25 = arith.constant 0 : index
    %c0_26 = arith.constant 0 : index
    %66 = vector.load %arg12[%c0_25, %c0_26] : memref<80x1xf32, #tpu.memory_space<vmem>>, vector<80x1xf32>
    %67 = vector.broadcast %3 : f32 to vector<40x384xf32>
    %68 = arith.subf %64, %67 : vector<40x384xf32>
    %69 = vector.broadcast %4 : f32 to vector<40x384xf32>
    %70 = arith.mulf %68, %69 : vector<40x384xf32>
    %71 = math.floor %70 : vector<40x384xf32>
    %cst_27 = arith.constant 0.000000e+00 : f32
    %cst_28 = arith.constant 2.550000e+02 : f32
    %72 = vector.broadcast %cst_27 : f32 to vector<40x384xf32>
    %73 = arith.maximumf %72, %71 : vector<40x384xf32>
    %74 = vector.broadcast %cst_28 : f32 to vector<40x384xf32>
    %75 = arith.minimumf %74, %73 : vector<40x384xf32>
    %76 = arith.truncf %75 : vector<40x384xf32> to vector<40x384xbf16>
    %cst_29 = arith.constant dense<0.000000e+00> : vector<80x384xf32>
    %77 = tpu.matmul %65, %76, %cst_29 {dimension_numbers = #tpu.dot_dimension_numbers<[1], [0], [0], [1], [0, 0, 1, 1], [], []>} : vector<80x40xbf16>, vector<40x384xbf16>, vector<80x384xf32> -> vector<80x384xf32>
    %78 = vector.broadcast %5 : f32 to vector<80x384xf32>
    %79 = arith.mulf %77, %78 : vector<80x384xf32>
    %80 = vector.broadcast %66 : vector<80x1xf32> to vector<80x384xf32>
    %81 = arith.addf %79, %80 : vector<80x384xf32>
    %cst_30 = arith.constant 0.000000e+00 : f32
    %82 = vector.broadcast %cst_30 : f32 to vector<80x384xf32>
    %83 = arith.maximumf %81, %82 : vector<80x384xf32>
    %c0_31 = arith.constant 0 : index
    %c0_32 = arith.constant 0 : index
    %84 = vector.load %arg9[%c0_31, %c0_32] : memref<16x80xbf16, #tpu.memory_space<vmem>>, vector<16x80xbf16>
    %c0_33 = arith.constant 0 : index
    %c0_34 = arith.constant 0 : index
    %85 = vector.load %arg13[%c0_33, %c0_34] : memref<16x1xf32, #tpu.memory_space<vmem>>, vector<16x1xf32>
    %86 = vector.broadcast %9 : f32 to vector<80x384xf32>
    %87 = arith.subf %83, %86 : vector<80x384xf32>
    %88 = vector.broadcast %10 : f32 to vector<80x384xf32>
    %89 = arith.mulf %87, %88 : vector<80x384xf32>
    %90 = math.floor %89 : vector<80x384xf32>
    %cst_35 = arith.constant 0.000000e+00 : f32
    %cst_36 = arith.constant 2.550000e+02 : f32
    %91 = vector.broadcast %cst_35 : f32 to vector<80x384xf32>
    %92 = arith.maximumf %91, %90 : vector<80x384xf32>
    %93 = vector.broadcast %cst_36 : f32 to vector<80x384xf32>
    %94 = arith.minimumf %93, %92 : vector<80x384xf32>
    %95 = arith.truncf %94 : vector<80x384xf32> to vector<80x384xbf16>
    %cst_37 = arith.constant dense<0.000000e+00> : vector<16x384xf32>
    %96 = tpu.matmul %84, %95, %cst_37 {dimension_numbers = #tpu.dot_dimension_numbers<[1], [0], [0], [1], [0, 0, 1, 1], [], []>} : vector<16x80xbf16>, vector<80x384xbf16>, vector<16x384xf32> -> vector<16x384xf32>
    %97 = vector.broadcast %11 : f32 to vector<16x384xf32>
    %98 = arith.mulf %96, %97 : vector<16x384xf32>
    %99 = vector.broadcast %85 : vector<16x1xf32> to vector<16x384xf32>
    %100 = arith.addf %98, %99 : vector<16x384xf32>
    %101 = vector.extract_strided_slice %100 {offsets = [0, 0], sizes = [8, 384], strides = [1, 1]} : vector<16x384xf32> to vector<8x384xf32>
    %102 = arith.negf %101 : vector<8x384xf32>
    %103 = math.exp %102 : vector<8x384xf32>
    %cst_38 = arith.constant 1.000000e+00 : f32
    %104 = vector.broadcast %cst_38 : f32 to vector<8x384xf32>
    %105 = arith.addf %104, %103 : vector<8x384xf32>
    %106 = arith.divf %104, %105 : vector<8x384xf32>
    %107 = vector.extract_strided_slice %100 {offsets = [8, 0], sizes = [8, 384], strides = [1, 1]} : vector<16x384xf32> to vector<8x384xf32>
    %108 = math.tanh %107 : vector<8x384xf32>
    %109 = arith.mulf %106, %108 : vector<8x384xf32>
    %c0_39 = arith.constant 0 : index
    %c0_40 = arith.constant 0 : index
    %110 = vector.load %arg4[%c0_39, %c0_40] : memref<1x384xf32, #tpu.memory_space<vmem>>, vector<1x384xf32>
    %111 = vector.broadcast %110 : vector<1x384xf32> to vector<8x384xf32>
    %112 = arith.mulf %109, %111 : vector<8x384xf32>
    %113 = vector.extract_strided_slice %112 {offsets = [0, 0], sizes = [8, 128], strides = [1, 1]} : vector<8x384xf32> to vector<8x128xf32>
    %114 = vector.extract_strided_slice %112 {offsets = [0, 128], sizes = [8, 128], strides = [1, 1]} : vector<8x384xf32> to vector<8x128xf32>
    %115 = arith.addf %113, %114 : vector<8x128xf32>
    %116 = vector.extract_strided_slice %112 {offsets = [0, 256], sizes = [8, 128], strides = [1, 1]} : vector<8x384xf32> to vector<8x128xf32>
    %117 = arith.addf %115, %116 : vector<8x128xf32>
    %c0_41 = arith.constant 0 : index
    %c0_42 = arith.constant 0 : index
    %118 = vector.load %arg15[%c0_41, %c0_42] : memref<8x128xf32, #tpu.memory_space<vmem>>, vector<8x128xf32>
    tpu.vector_store %arg15[%c0_41, %c0_42], %117 {strides = array<i32>} : memref<8x128xf32, #tpu.memory_space<vmem>>, vector<8x128xf32>,
    %cst_43 = arith.constant dense<0.000000e+00> : vector<8xf32>
    %119 = vector.multi_reduction <add>, %61, %cst_43 [1] : vector<8x128xf32> to vector<8xf32>
    %120 = vector.shape_cast %119 : vector<8xf32> to vector<8x1xf32>
    %121 = arith.mulf %61, %61 : vector<8x128xf32>
    %cst_44 = arith.constant dense<0.000000e+00> : vector<8xf32>
    %122 = vector.multi_reduction <add>, %121, %cst_44 [1] : vector<8x128xf32> to vector<8xf32>
    %123 = vector.shape_cast %122 : vector<8xf32> to vector<8x1xf32>
    %cst_45 = arith.constant dense<0.000000e+00> : vector<8xf32>
    %124 = vector.multi_reduction <add>, %117, %cst_45 [1] : vector<8x128xf32> to vector<8xf32>
    %125 = vector.shape_cast %124 : vector<8xf32> to vector<8x1xf32>
    %126 = arith.mulf %117, %117 : vector<8x128xf32>
    %cst_46 = arith.constant dense<0.000000e+00> : vector<8xf32>
    %127 = vector.multi_reduction <add>, %126, %cst_46 [1] : vector<8x128xf32> to vector<8xf32>
    %128 = vector.shape_cast %127 : vector<8xf32> to vector<8x1xf32>
    %129 = tpu.concatenate %120, %123, %125, %128 in 1 : vector<8x1xf32>, vector<8x1xf32>, vector<8x1xf32>, vector<8x1xf32> -> vector<8x4xf32>
    %130 = vector.shape_cast %129 : vector<8x4xf32> to vector<1x8x4xf32>
    %c0_47 = arith.constant 0 : index
    %c0_48 = arith.constant 0 : index
    %c0_49 = arith.constant 0 : index
    %131 = vector.load %arg16[%c0_47, %c0_48, %c0_49] : memref<1x8x4xf32, #tpu.memory_space<vmem>>, vector<1x8x4xf32>
    tpu.vector_store %arg16[%c0_47, %c0_48, %c0_49], %130 {strides = array<i32>} : memref<1x8x4xf32, #tpu.memory_space<vmem>>, vector<1x8x4xf32>,
    return
  }
  func.func @transform_0(%arg0: i32) -> i32 {
    %c0_i32 = arith.constant 0 : i32
    %c0_i32_0 = arith.constant 0 : i32
    return %c0_i32 : i32
  }
  func.func @transform_1(%arg0: i32) -> (i32, i32) {
    %c0_i32 = arith.constant 0 : i32
    %c0_i32_0 = arith.constant 0 : i32
    return %c0_i32, %arg0 : i32, i32
  }
  func.func @transform_2(%arg0: i32) -> (i32, i32) {
    %c0_i32 = arith.constant 0 : i32
    %c0_i32_0 = arith.constant 0 : i32
    return %c0_i32, %arg0 : i32, i32
  }
  func.func @transform_3(%arg0: i32) -> (i32, i32) {
    %c0_i32 = arith.constant 0 : i32
    %c0_i32_0 = arith.constant 0 : i32
    return %c0_i32, %arg0 : i32, i32
  }
  func.func @transform_4(%arg0: i32) -> (i32, i32) {
    %c0_i32 = arith.constant 0 : i32
    %c0_i32_0 = arith.constant 0 : i32
    return %c0_i32, %arg0 : i32, i32
  }
  func.func @transform_5(%arg0: i32) -> (i32, i32) {
    %c0_i32 = arith.constant 0 : i32
    %c0_i32_0 = arith.constant 0 : i32
    %c0_i32_1 = arith.constant 0 : i32
    return %c0_i32, %c0_i32_0 : i32, i32
  }
  func.func @transform_6(%arg0: i32) -> (i32, i32) {
    %c0_i32 = arith.constant 0 : i32
    %c0_i32_0 = arith.constant 0 : i32
    %c0_i32_1 = arith.constant 0 : i32
    return %c0_i32, %c0_i32_0 : i32, i32
  }
  func.func @transform_7(%arg0: i32) -> (i32, i32) {
    %c0_i32 = arith.constant 0 : i32
    %c0_i32_0 = arith.constant 0 : i32
    %c0_i32_1 = arith.constant 0 : i32
    return %c0_i32, %c0_i32_0 : i32, i32
  }
  func.func @transform_8(%arg0: i32) -> (i32, i32) {
    %c0_i32 = arith.constant 0 : i32
    %c0_i32_0 = arith.constant 0 : i32
    %c0_i32_1 = arith.constant 0 : i32
    return %c0_i32, %c0_i32_0 : i32, i32
  }
  func.func @transform_9(%arg0: i32) -> (i32, i32) {
    %c0_i32 = arith.constant 0 : i32
    %c0_i32_0 = arith.constant 0 : i32
    %c0_i32_1 = arith.constant 0 : i32
    return %c0_i32, %c0_i32_0 : i32, i32
  }
  func.func @transform_10(%arg0: i32) -> (i32, i32) {
    %c0_i32 = arith.constant 0 : i32
    %c0_i32_0 = arith.constant 0 : i32
    %c0_i32_1 = arith.constant 0 : i32
    return %c0_i32, %c0_i32_0 : i32, i32
  }
  func.func @transform_11(%arg0: i32) -> (i32, i32) {
    %c0_i32 = arith.constant 0 : i32
    %c0_i32_0 = arith.constant 0 : i32
    %c0_i32_1 = arith.constant 0 : i32
    return %c0_i32, %c0_i32_0 : i32, i32
  }
  func.func @transform_12(%arg0: i32) -> (i32, i32) {
    %c0_i32 = arith.constant 0 : i32
    %c0_i32_0 = arith.constant 0 : i32
    %c0_i32_1 = arith.constant 0 : i32
    return %c0_i32, %c0_i32_0 : i32, i32
  }
  func.func @transform_13(%arg0: i32) -> (i32, i32) {
    %c0_i32 = arith.constant 0 : i32
    %c0_i32_0 = arith.constant 0 : i32
    return %c0_i32, %arg0 : i32, i32
  }
  func.func @transform_14(%arg0: i32) -> (i32, i32) {
    %c0_i32 = arith.constant 0 : i32
    %c0_i32_0 = arith.constant 0 : i32
    return %c0_i32, %arg0 : i32, i32
  }
  func.func @transform_15(%arg0: i32) -> (i32, i32, i32) {
    %c0_i32 = arith.constant 0 : i32
    %c0_i32_0 = arith.constant 0 : i32
    %c0_i32_1 = arith.constant 0 : i32
    return %arg0, %c0_i32, %c0_i32_0 : i32, i32, i32
  }
}

</mosaic_0001>

<llo_original>
// kernel: edge_update.2
$region0: #{edge_update.2}
  #allocation0 [shape = 'u32[]', space=smem, size = 0x4, offset = 0x4, fixed_abs, tag = 'smem constant byte address 0x4 - core index']
  #allocation1 [shape = 'u32[72,128]{1,0:T(1,128)}', space=vmem, size = 0x9000, scoped, tag = 'internal scratch']
  %s0 = inlined_call_operand.vmem [shape: f32[6], index: 0, kind: input, shape index: {}]
  %s1 = inlined_call_operand.vmem [shape: bf16[16,128], index: 1, kind: input, shape index: {}]
  %s2 = inlined_call_operand.vmem [shape: bf16[40,384], index: 2, kind: input, shape index: {}]
  %s3 = inlined_call_operand.vmem [shape: bf16[64,16], index: 3, kind: input, shape index: {}]
  %s4 = inlined_call_operand.vmem [shape: bf16[80,40], index: 4, kind: input, shape index: {}]
  %s5 = inlined_call_operand.vmem [shape: f32[64,1], index: 5, kind: input, shape index: {}]
  %s6 = inlined_call_operand.vmem [shape: f32[80,1], index: 6, kind: input, shape index: {}]
  %s7 = inlined_call_operand.vmem [shape: f32[1,8,128], index: 7, kind: output, shape index: {}]
  %s8 = sld [smem:[#allocation0]]
  $region42: #{edge_update.2} parent=0
    _
  %s10 = ssub.s32 1, %s8
  %s11 = scalar_select 0, %s10, %s8
  $region1: #{edge_update.2} parent=0
    #allocation2 [shape = 'u8[512]{0}', space=smem, size = 0x200, scoped, tag = 'input window, operand 0, single buffered']
    #allocation3 [shape = 's32[1]{0}', space=sflag, size = 0x4, scoped, tag = 'scoped memory for edge_update.2']
    %12 = vsyncpa [#allocation3], 0
    // Predicated region
    $region2: #{edge_update.2} parent=1 // pred_check
      _
    $region3: #{edge_update.2} parent=1 // pred_check_branch
      %14 = sbr.rel (0) target = $region5
    $region4: #{edge_update.2} parent=1 // pred_region
      %16 = vsyncadd [#allocation3], 0
      %s18 = sshll.u32 %s0, 4
      %s19 = int_to_ptr.vmem [resolvable:$true] %s18
      %21 = dma.vmem_to_smem %s19, 16, [#allocation2], [#allocation3]
    $region5: #{edge_update.2} parent=1 // pred_fallthru
      _
    // Predicated region
    $region6: #{edge_update.2} parent=1 // pred_check
      _
    $region7: #{edge_update.2} parent=1 // pred_check_branch
      %23 = sbr.rel (0) target = $region9
    $region8: #{edge_update.2} parent=1 // pred_region
      _
    $region9: #{edge_update.2} parent=1 // pred_fallthru
      _
    // Predicated region
    $region10: #{edge_update.2} parent=1 // pred_check
      _
    $region11: #{edge_update.2} parent=1 // pred_check_branch
      %25 = sbr.rel (0) target = $region13
    $region12: #{edge_update.2} parent=1 // pred_region
      _
    $region13: #{edge_update.2} parent=1 // pred_fallthru
      _
    // Predicated region
    $region14: #{edge_update.2} parent=1 // pred_check
      _
    $region15: #{edge_update.2} parent=1 // pred_check_branch
      %27 = sbr.rel (0) target = $region17
    $region16: #{edge_update.2} parent=1 // pred_region
      _
    $region17: #{edge_update.2} parent=1 // pred_fallthru
      _
    // Predicated region
    $region18: #{edge_update.2} parent=1 // pred_check
      _
    $region19: #{edge_update.2} parent=1 // pred_check_branch
      %29 = sbr.rel (0) target = $region21
    $region20: #{edge_update.2} parent=1 // pred_region
      _
    $region21: #{edge_update.2} parent=1 // pred_fallthru
      _
    // Predicated region
    $region22: #{edge_update.2} parent=1 // pred_check
      _
    $region23: #{edge_update.2} parent=1 // pred_check_branch
      %31 = sbr.rel (0) target = $region25
    $region24: #{edge_update.2} parent=1 // pred_region
      _
    $region25: #{edge_update.2} parent=1 // pred_fallthru
      _
    // Predicated region
    $region26: #{edge_update.2} parent=1 // pred_check
      _
    $region27: #{edge_update.2} parent=1 // pred_check_branch
      %33 = sbr.rel (0) target = $region29
    $region28: #{edge_update.2} parent=1 // pred_region
      _
    $region29: #{edge_update.2} parent=1 // pred_fallthru
      _
    // Predicated region
    $region30: #{edge_update.2} parent=1 // pred_check
      _
    $region31: #{edge_update.2} parent=1 // pred_check_branch
      %35 = sbr.rel (0) target = $region33
    $region32: #{edge_update.2} parent=1 // pred_region
      %37 = dma.done [#allocation3], 16
    $region33: #{edge_update.2} parent=1 // pred_fallthru
      _
    %38 = sfence
    %s40 = sld [smem:[#allocation2]]
    %s41 = sld [smem:[#allocation2 + $0x1]]
    %s42 = sld [smem:[#allocation2 + $0x2]]
    %s43 = sld [smem:[#allocation2 + $0x3]]
    %s44 = sld [smem:[#allocation2 + $0x4]]
    %s45 = sld [smem:[#allocation2 + $0x5]]
    %v46 = vld [vmem:[%s1] sm:$0xf]
    %v47 = vld [vmem:[%s1 + $0x4] sm:$0xf]
    %v48 = vunpack.c.l.bf16 %v46
    %v49 = vunpack.c.l.bf16 %v47
    %v50 = vld [vmem:[%s3] sm:$0xf]
    %v51 = vld [vmem:[%s3 + $0x4] sm:$0xf]
    %v52 = vld [vmem:[%s3 + $0x8] sm:$0xf]
    %v53 = vld [vmem:[%s3 + $0xc] sm:$0xf]
    %v54 = vld [vmem:[%s3 + $0x10] sm:$0xf]
    %v55 = vld [vmem:[%s3 + $0x14] sm:$0xf]
    %v56 = vld [vmem:[%s3 + $0x18] sm:$0xf]
    %v57 = vld [vmem:[%s3 + $0x1c] sm:$0xf]
    %v58 = vld [vmem:[%s5] sm:$0xff]
    %v59 = vld [vmem:[%s5 + $0x8] sm:$0xff]
    %v60 = vld [vmem:[%s5 + $0x10] sm:$0xff]
    %v61 = vld [vmem:[%s5 + $0x18] sm:$0xff]
    %v62 = vld [vmem:[%s5 + $0x20] sm:$0xff]
    %v63 = vld [vmem:[%s5 + $0x28] sm:$0xff]
    %v64 = vld [vmem:[%s5 + $0x30] sm:$0xff]
    %v65 = vld [vmem:[%s5 + $0x38] sm:$0xff]
    %v66 = vstv %s40
    %v67 = vsub.f32 %v48, %v66
    %v68 = vsub.f32 %v49, %v66
    %v69 = vstv %s41
    %v70 = vmul.f32 %v67, %v69
    %v71 = vmul.f32 %v68, %v69
    %v72 = vfloor.f32 %v70
    %v73 = vfloor.f32 %v71
    %v74 = vmax.f32 %v72, 0.0
    %v75 = vmax.f32 %v73, 0.0
    %v76 = vmin.f32 %v74, 255.0
    %v77 = vmin.f32 %v75, 255.0
    %v78 = vpack.c.bf16 %v77, %v76
    %v87 = vunpack.c.l.b16 %v50
    %v88 = vunpack.c.l.b16 %v51
    %v89 = vunpack.c.l.b16 %v52
    %v90 = vunpack.c.l.b16 %v53
    %v91 = vunpack.c.l.b16 %v54
    %v92 = vunpack.c.l.b16 %v55
    %v93 = vunpack.c.l.b16 %v56
    %v94 = vunpack.c.l.b16 %v57
    %v95 = vpack.c.b16 %v88, %v87
    %v96 = vpack.c.b16 %v90, %v89
    %v97 = vpack.c.b16 %v92, %v91
    %v98 = vpack.c.b16 %v94, %v93
    %vm99 = vcmask 130048
    %v101 = vsel %vm99, %v95, 0
    %v104 = vsel %vm99, %v96, 0
    %v107 = vsel %vm99, %v97, 0
    %v110 = vsel %vm99, %v98, 0
    %112 = vmatpush.bf16.msra.mxu0 0
    %113 = vmatpush.bf16.msra.mxu0 0
    %114 = vmatpush.bf16.msra.mxu0 0
    %115 = vmatpush.bf16.msra.mxu0 0
    %116 = vmatpush.bf16.msra.mxu0 0
    %117 = vmatpush.bf16.msra.mxu0 0
    %118 = vmatpush.bf16.msra.mxu0 0
    %119 = vmatpush.bf16.msra.mxu0 %v78
    %120 = vmatmul.bf16.gmra.mxu0 %v101
    %v121 = vpop.f32.mrf.mxu0
    %v122 = vadd.f32 0.0, %v121
    %v123 = vpop.f32.mrf.mxu0
    %v124 = vadd.f32 0.0, %v123
    %125 = vmatmul.bf16.gmra.mxu0 %v104
    %v126 = vpop.f32.mrf.mxu0
    %v127 = vadd.f32 0.0, %v126
    %v128 = vpop.f32.mrf.mxu0
    %v129 = vadd.f32 0.0, %v128
    %130 = vmatmul.bf16.gmra.mxu0 %v107
    %v131 = vpop.f32.mrf.mxu0
    %v132 = vadd.f32 0.0, %v131
    %v133 = vpop.f32.mrf.mxu0
    %v134 = vadd.f32 0.0, %v133
    %135 = vmatmul.bf16.gmra.mxu0 %v110
    %v136 = vpop.f32.mrf.mxu0
    %v137 = vadd.f32 0.0, %v136
    %v138 = vpop.f32.mrf.mxu0
    %v139 = vadd.f32 0.0, %v138
    %140 = vdwg.mxu0
    %v141 = vstv %s42
    %v142 = vmul.f32 %v122, %v141
    %v143 = vmul.f32 %v124, %v141
    %v144 = vmul.f32 %v127, %v141
    %v145 = vmul.f32 %v129, %v141
    %v146 = vmul.f32 %v132, %v141
    %v147 = vmul.f32 %v134, %v141
    %v148 = vmul.f32 %v137, %v141
    %v149 = vmul.f32 %v139, %v141
    %151 = vset.pattern.permute.xlu0 0
    %152 = vperm.xlu0 %151, %v58
    %v153 = vpop.permute.xlu0 %152
    %156 = vset.pattern.permute.xlu0 0
    %157 = vperm.xlu0 %156, %v59
    %v158 = vpop.permute.xlu0 %157
    %161 = vset.pattern.permute.xlu0 0
    %162 = vperm.xlu0 %161, %v60
    %v163 = vpop.permute.xlu0 %162
    %166 = vset.pattern.permute.xlu0 0
    %167 = vperm.xlu0 %166, %v61
    %v168 = vpop.permute.xlu0 %167
    %171 = vset.pattern.permute.xlu0 0
    %172 = vperm.xlu0 %171, %v62
    %v173 = vpop.permute.xlu0 %172
    %176 = vset.pattern.permute.xlu0 0
    %177 = vperm.xlu0 %176, %v63
    %v178 = vpop.permute.xlu0 %177
    %181 = vset.pattern.permute.xlu0 0
    %182 = vperm.xlu0 %181, %v64
    %v183 = vpop.permute.xlu0 %182
    %186 = vset.pattern.permute.xlu0 0
    %187 = vperm.xlu0 %186, %v65
    %v188 = vpop.permute.xlu0 %187
    %v190 = vadd.f32 %v142, %v153
    %v191 = vadd.f32 %v143, %v158
    %v192 = vadd.f32 %v144, %v163
    %v193 = vadd.f32 %v145, %v168
    %v194 = vadd.f32 %v146, %v173
    %v195 = vadd.f32 %v147, %v178
    %v196 = vadd.f32 %v148, %v183
    %v197 = vadd.f32 %v149, %v188
    %v198 = vmax.f32 %v190, 0.0
    %v199 = vmax.f32 %v191, 0.0
    %v200 = vmax.f32 %v192, 0.0
    %v201 = vmax.f32 %v193, 0.0
    %v202 = vmax.f32 %v194, 0.0
    %v203 = vmax.f32 %v195, 0.0
    %v204 = vmax.f32 %v196, 0.0
    %v205 = vmax.f32 %v197, 0.0
    %v206 = vld [vmem:[%s2] sm:$0xff]
    %v207 = vld [vmem:[%s2 + $0x8] sm:$0xf]
    %v208 = vld [vmem:[%s2 + $0xc] sm:$0xff]
    %v209 = vld [vmem:[%s2 + $0x14] sm:$0xf]
    %v210 = vld [vmem:[%s2 + $0x18] sm:$0xff]
    %v211 = vld [vmem:[%s2 + $0x20] sm:$0xf]
    %v212 = vld [vmem:[%s2 + $0x24] sm:$0xff]
    %v213 = vld [vmem:[%s2 + $0x2c] sm:$0xf]
    %v214 = vld [vmem:[%s2 + $0x30] sm:$0xff]
    %v215 = vld [vmem:[%s2 + $0x38] sm:$0xf]
    %v216 = vunpack.c.l.bf16 %v206
    %v217 = vunpack.c.h.bf16 %v206
    %v218 = vunpack.c.l.bf16 %v207
    %v219 = vunpack.c.l.bf16 %v208
    %v220 = vunpack.c.h.bf16 %v208
    %v221 = vunpack.c.l.bf16 %v209
    %v222 = vunpack.c.l.bf16 %v210
    %v223 = vunpack.c.h.bf16 %v210
    %v224 = vunpack.c.l.bf16 %v211
    %v225 = vunpack.c.l.bf16 %v212
    %v226 = vunpack.c.h.bf16 %v212
    %v227 = vunpack.c.l.bf16 %v213
    %v228 = vunpack.c.l.bf16 %v214
    %v229 = vunpack.c.h.bf16 %v214
    %v230 = vunpack.c.l.bf16 %v215
    %v231 = vld [vmem:[%s4] sm:$0xf]
    %v232 = vld [vmem:[%s4 + $0x4] sm:$0xf]
    %v233 = vld [vmem:[%s4 + $0x8] sm:$0xf]
    %v234 = vld [vmem:[%s4 + $0xc] sm:$0xf]
    %v235 = vld [vmem:[%s4 + $0x10] sm:$0xf]
    %v236 = vld [vmem:[%s4 + $0x14] sm:$0xf]
    %v237 = vld [vmem:[%s4 + $0x18] sm:$0xf]
    %v238 = vld [vmem:[%s4 + $0x1c] sm:$0xf]
    %v239 = vld [vmem:[%s4 + $0x20] sm:$0xf]
    %v240 = vld [vmem:[%s4 + $0x24] sm:$0xf]
    %v241 = vld [vmem:[%s6] sm:$0xff]
    %v242 = vld [vmem:[%s6 + $0x8] sm:$0xff]
    %v243 = vld [vmem:[%s6 + $0x10] sm:$0xff]
    %v244 = vld [vmem:[%s6 + $0x18] sm:$0xff]
    %v245 = vld [vmem:[%s6 + $0x20] sm:$0xff]
    %v246 = vld [vmem:[%s6 + $0x28] sm:$0xff]
    %v247 = vld [vmem:[%s6 + $0x30] sm:$0xff]
    %v248 = vld [vmem:[%s6 + $0x38] sm:$0xff]
    %v249 = vld [vmem:[%s6 + $0x40] sm:$0xff]
    %v250 = vld [vmem:[%s6 + $0x48] sm:$0xff]
    %v251 = vstv %s43
    %v252 = vsub.f32 %v216, %v251
    %v253 = vsub.f32 %v217, %v251
    %v254 = vsub.f32 %v218, %v251
    %v255 = vsub.f32 %v219, %v251
    %v256 = vsub.f32 %v220, %v251
    %v257 = vsub.f32 %v221, %v251
    %v258 = vsub.f32 %v222, %v251
    %v259 = vsub.f32 %v223, %v251
    %v260 = vsub.f32 %v224, %v251
    %v261 = vsub.f32 %v225, %v251
    %v262 = vsub.f32 %v226, %v251
    %v263 = vsub.f32 %v227, %v251
    %v264 = vsub.f32 %v228, %v251
    %v265 = vsub.f32 %v229, %v251
    %v266 = vsub.f32 %v230, %v251
    %v267 = vstv %s44
    %v268 = vmul.f32 %v252, %v267
    %v269 = vmul.f32 %v253, %v267
    %v270 = vmul.f32 %v254, %v267
    %v271 = vmul.f32 %v255, %v267
    %v272 = vmul.f32 %v256, %v267
    %v273 = vmul.f32 %v257, %v267
    %v274 = vmul.f32 %v258, %v267
    %v275 = vmul.f32 %v259, %v267
    %v276 = vmul.f32 %v260, %v267
    %v277 = vmul.f32 %v261, %v267
    %v278 = vmul.f32 %v262, %v267
    %v279 = vmul.f32 %v263, %v267
    %v280 = vmul.f32 %v264, %v267
    %v281 = vmul.f32 %v265, %v267
    %v282 = vmul.f32 %v266, %v267
    %v283 = vfloor.f32 %v268
    %v284 = vfloor.f32 %v269
    %v285 = vfloor.f32 %v270
    %v286 = vfloor.f32 %v271
    %v287 = vfloor.f32 %v272
    %v288 = vfloor.f32 %v273
    %v289 = vfloor.f32 %v274
    %v290 = vfloor.f32 %v275
    %v291 = vfloor.f32 %v276
    %v292 = vfloor.f32 %v277
    %v293 = vfloor.f32 %v278
    %v294 = vfloor.f32 %v279
    %v295 = vfloor.f32 %v280
    %v296 = vfloor.f32 %v281
    %v297 = vfloor.f32 %v282
    %v298 = vmax.f32 %v283, 0.0
    %v299 = vmax.f32 %v284, 0.0
    %v300 = vmax.f32 %v285, 0.0
    %v301 = vmax.f32 %v286, 0.0
    %v302 = vmax.f32 %v287, 0.0
    %v303 = vmax.f32 %v288, 0.0
    %v304 = vmax.f32 %v289, 0.0
    %v305 = vmax.f32 %v290, 0.0
    %v306 = vmax.f32 %v291, 0.0
    %v307 = vmax.f32 %v292, 0.0
    %v308 = vmax.f32 %v293, 0.0
    %v309 = vmax.f32 %v294, 0.0
    %v310 = vmax.f32 %v295, 0.0
    %v311 = vmax.f32 %v296, 0.0
    %v312 = vmax.f32 %v297, 0.0
    %v313 = vmin.f32 %v298, 255.0
    %v314 = vmin.f32 %v299, 255.0
    %v315 = vmin.f32 %v300, 255.0
    %v316 = vmin.f32 %v301, 255.0
    %v317 = vmin.f32 %v302, 255.0
    %v318 = vmin.f32 %v303, 255.0
    %v319 = vmin.f32 %v304, 255.0
    %v320 = vmin.f32 %v305, 255.0
    %v321 = vmin.f32 %v306, 255.0
    %v322 = vmin.f32 %v307, 255.0
    %v323 = vmin.f32 %v308, 255.0
    %v324 = vmin.f32 %v309, 255.0
    %v325 = vmin.f32 %v310, 255.0
    %v326 = vmin.f32 %v311, 255.0
    %v327 = vmin.f32 %v312, 255.0
    %v328 = vpack.c.bf16 %v316, %v313
    %v329 = vpack.c.bf16 %v317, %v314
    %v330 = vpack.c.bf16 %v318, %v315
    %v331 = vpack.c.bf16 %v322, %v319
    %v332 = vpack.c.bf16 %v323, %v320
    %v333 = vpack.c.bf16 %v324, %v321
    %v334 = vpack.c.bf16 %v325, %v325
    %v335 = vpack.c.bf16 %v326, %v326
    %v336 = vpack.c.bf16 %v327, %v327
    %v347 = vunpack.c.l.b16 %v231
    %v348 = vunpack.c.l.b16 %v232
    %v349 = vunpack.c.l.b16 %v233
    %v350 = vunpack.c.l.b16 %v234
    %v351 = vunpack.c.l.b16 %v235
    %v352 = vunpack.c.l.b16 %v236
    %v353 = vunpack.c.l.b16 %v237
    %v354 = vunpack.c.l.b16 %v238
    %v355 = vunpack.c.l.b16 %v239
    %v356 = vunpack.c.l.b16 %v240
    %v357 = vpack.c.b16 %v348, %v347
    %v358 = vpack.c.b16 %v350, %v349
    %v359 = vpack.c.b16 %v352, %v351
    %v360 = vpack.c.b16 %v354, %v353
    %v361 = vpack.c.b16 %v356, %v355
    %vm362 = vcmask 326656
    %v364 = vsel %vm362, %v357, 0
    %v367 = vsel %vm362, %v358, 0
    %v370 = vsel %vm362, %v359, 0
    %v373 = vsel %vm362, %v360, 0
    %v376 = vsel %vm362, %v361, 0
    %vm378 = vcmask 1043456
    %v380 = vsel %vm378, %v334, 0
    %v383 = vsel %vm378, %v335, 0
    %v386 = vsel %vm378, %v336, 0
    %388 = vmatpush.bf16.msra.mxu0 0
    %389 = vmatpush.bf16.msra.mxu0 0
    %390 = vmatpush.bf16.msra.mxu0 0
    %391 = vmatpush.bf16.msra.mxu0 0
    %392 = vmatpush.bf16.msra.mxu0 0
    %393 = vmatpush.bf16.msra.mxu0 %v380
    %394 = vmatpush.bf16.msra.mxu0 %v331
    %395 = vmatpush.bf16.msra.mxu0 %v328
    %396 = vmatmul.bf16.gmra.mxu0 %v364
    %v397 = vpop.f32.mrf.mxu0
    %v398 = vadd.f32 0.0, %v397
    %v399 = vpop.f32.mrf.mxu0
    %v400 = vadd.f32 0.0, %v399
    %401 = vmatmul.bf16.gmra.mxu0 %v367
    %v402 = vpop.f32.mrf.mxu0
    %v403 = vadd.f32 0.0, %v402
    %v404 = vpop.f32.mrf.mxu0
    %v405 = vadd.f32 0.0, %v404
    %406 = vmatmul.bf16.gmra.mxu0 %v370
    %v407 = vpop.f32.mrf.mxu0
    %v408 = vadd.f32 0.0, %v407
    %v409 = vpop.f32.mrf.mxu0
    %v410 = vadd.f32 0.0, %v409
    %411 = vmatmul.bf16.gmra.mxu0 %v373
    %v412 = vpop.f32.mrf.mxu0
    %v413 = vadd.f32 0.0, %v412
    %v414 = vpop.f32.mrf.mxu0
    %v415 = vadd.f32 0.0, %v414
    %416 = vmatmul.bf16.gmra.mxu0 %v376
    %v417 = vpop.f32.mrf.mxu0
    %v418 = vadd.f32 0.0, %v417
    %v419 = vpop.f32.mrf.mxu0
    %v420 = vadd.f32 0.0, %v419
    %421 = vdwg.mxu0
    %422 = vmatpush.bf16.msra.mxu0 0
    %423 = vmatpush.bf16.msra.mxu0 0
    %424 = vmatpush.bf16.msra.mxu0 0
    %425 = vmatpush.bf16.msra.mxu0 0
    %426 = vmatpush.bf16.msra.mxu0 0
    %427 = vmatpush.bf16.msra.mxu0 %v383
    %428 = vmatpush.bf16.msra.mxu0 %v332
    %429 = vmatpush.bf16.msra.mxu0 %v329
    %430 = vmatmul.bf16.gmra.mxu0 %v364
    %v431 = vpop.f32.mrf.mxu0
    %v432 = vadd.f32 0.0, %v431
    %v433 = vpop.f32.mrf.mxu0
    %v434 = vadd.f32 0.0, %v433
    %435 = vmatmul.bf16.gmra.mxu0 %v367
    %v436 = vpop.f32.mrf.mxu0
    %v437 = vadd.f32 0.0, %v436
    %v438 = vpop.f32.mrf.mxu0
    %v439 = vadd.f32 0.0, %v438
    %440 = vmatmul.bf16.gmra.mxu0 %v370
    %v441 = vpop.f32.mrf.mxu0
    %v442 = vadd.f32 0.0, %v441
    %v443 = vpop.f32.mrf.mxu0
    %v444 = vadd.f32 0.0, %v443
    %445 = vmatmul.bf16.gmra.mxu0 %v373
    %v446 = vpop.f32.mrf.mxu0
    %v447 = vadd.f32 0.0, %v446
    %v448 = vpop.f32.mrf.mxu0
    %v449 = vadd.f32 0.0, %v448
    %450 = vmatmul.bf16.gmra.mxu0 %v376
    %v451 = vpop.f32.mrf.mxu0
    %v452 = vadd.f32 0.0, %v451
    %v453 = vpop.f32.mrf.mxu0
    %v454 = vadd.f32 0.0, %v453
    %455 = vdwg.mxu0
    %456 = vmatpush.bf16.msra.mxu0 0
    %457 = vmatpush.bf16.msra.mxu0 0
    %458 = vmatpush.bf16.msra.mxu0 0
    %459 = vmatpush.bf16.msra.mxu0 0
    %460 = vmatpush.bf16.msra.mxu0 0
    %461 = vmatpush.bf16.msra.mxu0 %v386
    %462 = vmatpush.bf16.msra.mxu0 %v333
    %463 = vmatpush.bf16.msra.mxu0 %v330
    %464 = vmatmul.bf16.gmra.mxu0 %v364
    %v465 = vpop.f32.mrf.mxu0
    %v466 = vadd.f32 0.0, %v465
    %v467 = vpop.f32.mrf.mxu0
    %v468 = vadd.f32 0.0, %v467
    %469 = vmatmul.bf16.gmra.mxu0 %v367
    %v470 = vpop.f32.mrf.mxu0
    %v471 = vadd.f32 0.0, %v470
    %v472 = vpop.f32.mrf.mxu0
    %v473 = vadd.f32 0.0, %v472
    %474 = vmatmul.bf16.gmra.mxu0 %v370
    %v475 = vpop.f32.mrf.mxu0
    %v476 = vadd.f32 0.0, %v475
    %v477 = vpop.f32.mrf.mxu0
    %v478 = vadd.f32 0.0, %v477
    %479 = vmatmul.bf16.gmra.mxu0 %v373
    %v480 = vpop.f32.mrf.mxu0
    %v481 = vadd.f32 0.0, %v480
    %v482 = vpop.f32.mrf.mxu0
    %v483 = vadd.f32 0.0, %v482
    %484 = vmatmul.bf16.gmra.mxu0 %v376
    %v485 = vpop.f32.mrf.mxu0
    %v486 = vadd.f32 0.0, %v485
    %v487 = vpop.f32.mrf.mxu0
    %v488 = vadd.f32 0.0, %v487
    %489 = vdwg.mxu0
    %v490 = vstv %s45
    %v491 = vmul.f32 %v398, %v490
    %v492 = vmul.f32 %v432, %v490
    %v493 = vmul.f32 %v466, %v490
    %v494 = vmul.f32 %v400, %v490
    %v495 = vmul.f32 %v434, %v490
    %v496 = vmul.f32 %v468, %v490
    %v497 = vmul.f32 %v403, %v490
    %v498 = vmul.f32 %v437, %v490
    %v499 = vmul.f32 %v471, %v490
    %v500 = vmul.f32 %v405, %v490
    %v501 = vmul.f32 %v439, %v490
    %v502 = vmul.f32 %v473, %v490
    %v503 = vmul.f32 %v408, %v490
    %v504 = vmul.f32 %v442, %v490
    %v505 = vmul.f32 %v476, %v490
    %v506 = vmul.f32 %v410, %v490
    %v507 = vmul.f32 %v444, %v490
    %v508 = vmul.f32 %v478, %v490
    %v509 = vmul.f32 %v413, %v490
    %v510 = vmul.f32 %v447, %v490
    %v511 = vmul.f32 %v481, %v490
    %v512 = vmul.f32 %v415, %v490
    %v513 = vmul.f32 %v449, %v490
    %v514 = vmul.f32 %v483, %v490
    %v515 = vmul.f32 %v418, %v490
    %v516 = vmul.f32 %v452, %v490
    %v517 = vmul.f32 %v486, %v490
    %v518 = vmul.f32 %v420, %v490
    %v519 = vmul.f32 %v454, %v490
    %v520 = vmul.f32 %v488, %v490
    %522 = vset.pattern.permute.xlu0 0
    %523 = vperm.xlu0 %522, %v241
    %v524 = vpop.permute.xlu0 %523
    %527 = vset.pattern.permute.xlu0 0
    %528 = vperm.xlu0 %527, %v242
    %v529 = vpop.permute.xlu0 %528
    %532 = vset.pattern.permute.xlu0 0
    %533 = vperm.xlu0 %532, %v243
    %v534 = vpop.permute.xlu0 %533
    %537 = vset.pattern.permute.xlu0 0
    %538 = vperm.xlu0 %537, %v244
    %v539 = vpop.permute.xlu0 %538
    %542 = vset.pattern.permute.xlu0 0
    %543 = vperm.xlu0 %542, %v245
    %v544 = vpop.permute.xlu0 %543
    %547 = vset.pattern.permute.xlu0 0
    %548 = vperm.xlu0 %547, %v246
    %v549 = vpop.permute.xlu0 %548
    %552 = vset.pattern.permute.xlu0 0
    %553 = vperm.xlu0 %552, %v247
    %v554 = vpop.permute.xlu0 %553
    %557 = vset.pattern.permute.xlu0 0
    %558 = vperm.xlu0 %557, %v248
    %v559 = vpop.permute.xlu0 %558
    %562 = vset.pattern.permute.xlu0 0
    %563 = vperm.xlu0 %562, %v249
    %v564 = vpop.permute.xlu0 %563
    %567 = vset.pattern.permute.xlu0 0
    %568 = vperm.xlu0 %567, %v250
    %v569 = vpop.permute.xlu0 %568
    %v571 = vadd.f32 %v491, %v524
    %v572 = vadd.f32 %v492, %v524
    %v573 = vadd.f32 %v493, %v524
    %v574 = vadd.f32 %v494, %v529
    %v575 = vadd.f32 %v495, %v529
    %v576 = vadd.f32 %v496, %v529
    %v577 = vadd.f32 %v497, %v534
    %v578 = vadd.f32 %v498, %v534
    %v579 = vadd.f32 %v499, %v534
    %v580 = vadd.f32 %v500, %v539
    %v581 = vadd.f32 %v501, %v539
    %v582 = vadd.f32 %v502, %v539
    %v583 = vadd.f32 %v503, %v544
    %v584 = vadd.f32 %v504, %v544
    %v585 = vadd.f32 %v505, %v544
    %v586 = vadd.f32 %v506, %v549
    %v587 = vadd.f32 %v507, %v549
    %v588 = vadd.f32 %v508, %v549
    %v589 = vadd.f32 %v509, %v554
    %v590 = vadd.f32 %v510, %v554
    %v591 = vadd.f32 %v511, %v554
    %v592 = vadd.f32 %v512, %v559
    %v593 = vadd.f32 %v513, %v559
    %v594 = vadd.f32 %v514, %v559
    %v595 = vadd.f32 %v515, %v564
    %v596 = vadd.f32 %v516, %v564
    %v597 = vadd.f32 %v517, %v564
    %v598 = vadd.f32 %v518, %v569
    %v599 = vadd.f32 %v519, %v569
    %v600 = vadd.f32 %v520, %v569
    %v601 = vmax.f32 %v571, 0.0
    %v602 = vmax.f32 %v572, 0.0
    %v603 = vmax.f32 %v573, 0.0
    %v604 = vmax.f32 %v574, 0.0
    %v605 = vmax.f32 %v575, 0.0
    %v606 = vmax.f32 %v576, 0.0
    %v607 = vmax.f32 %v577, 0.0
    %v608 = vmax.f32 %v578, 0.0
    %v609 = vmax.f32 %v579, 0.0
    %v610 = vmax.f32 %v580, 0.0
    %v611 = vmax.f32 %v581, 0.0
    %v612 = vmax.f32 %v582, 0.0
    %v613 = vmax.f32 %v583, 0.0
    %v614 = vmax.f32 %v584, 0.0
    %v615 = vmax.f32 %v585, 0.0
    %v616 = vmax.f32 %v586, 0.0
    %v617 = vmax.f32 %v587, 0.0
    %v618 = vmax.f32 %v588, 0.0
    %v619 = vmax.f32 %v589, 0.0
    %v620 = vmax.f32 %v590, 0.0
    %v621 = vmax.f32 %v591, 0.0
    %v622 = vmax.f32 %v592, 0.0
    %v623 = vmax.f32 %v593, 0.0
    %v624 = vmax.f32 %v594, 0.0
    %v625 = vmax.f32 %v595, 0.0
    %v626 = vmax.f32 %v596, 0.0
    %v627 = vmax.f32 %v597, 0.0
    %v628 = vmax.f32 %v598, 0.0
    %v629 = vmax.f32 %v599, 0.0
    %v630 = vmax.f32 %v600, 0.0
    %v631 = vlaneseq
    %v632 = vand.u32 %v631, 127
    %vm633 = vcmp.eq.s32.totalorder %v632, 0
    %v634 = vmin.f32 %v198, %v202
    %v635 = vmin.f32 %v199, %v203
    %v636 = vmin.f32 %v200, %v204
    %v637 = vmin.f32 %v201, %v205
    %v638 = vmin.f32 %v634, %v635
    %v639 = vmin.f32 %v636, %v637
    %v640 = vmin.f32 %v638, %v639
    %641 = vmin.xlane.f32.xlu0 %v640
    %v642 = vpop.xlane.xlu0 %641
    %v643 = vrot.slane %v642, 4
    %v644 = vmin.f32 %v642, %v643
    %v645 = vrot.slane %v644, 2
    %v646 = vmin.f32 %v644, %v645
    %v647 = vrot.slane %v646, 1
    %v648 = vmin.f32 %v646, %v647
    %s649 = vtos %v648
    %vm650 = vcmp.eq.s32.totalorder %v632, 1
    %v651 = vmax.f32 %v198, %v202
    %v652 = vmax.f32 %v199, %v203
    %v653 = vmax.f32 %v200, %v204
    %v654 = vmax.f32 %v201, %v205
    %v655 = vmax.f32 %v651, %v652
    %v656 = vmax.f32 %v653, %v654
    %v657 = vmax.f32 %v655, %v656
    %658 = vmax.xlane.f32.xlu0 %v657
    %v659 = vpop.xlane.xlu0 %658
    %v660 = vrot.slane %v659, 4
    %v661 = vmax.f32 %v659, %v660
    %v662 = vrot.slane %v661, 2
    %v663 = vmax.f32 %v661, %v662
    %v664 = vrot.slane %v663, 1
    %v665 = vmax.f32 %v663, %v664
    %s666 = vtos %v665
    %vm667 = vcmp.eq.s32.totalorder %v632, 2
    %v668 = vmin.f32 %v601, %v605
    %v669 = vmin.f32 %v602, %v606
    %v670 = vmin.f32 %v603, %v607
    %v671 = vmin.f32 %v604, %v608
    %v672 = vmin.f32 %v668, %v609
    %v673 = vmin.f32 %v669, %v610
    %v674 = vmin.f32 %v670, %v611
    %v675 = vmin.f32 %v671, %v612
    %v676 = vmin.f32 %v672, %v613
    %v677 = vmin.f32 %v673, %v614
    %v678 = vmin.f32 %v674, %v615
    %v679 = vmin.f32 %v675, %v616
    %v680 = vmin.f32 %v676, %v617
    %v681 = vmin.f32 %v677, %v618
    %v682 = vmin.f32 %v678, %v619
    %v683 = vmin.f32 %v679, %v620
    %v684 = vmin.f32 %v680, %v621
    %v685 = vmin.f32 %v681, %v622
    %v686 = vmin.f32 %v682, %v623
    %v687 = vmin.f32 %v683, %v624
    %v688 = vmin.f32 %v684, %v625
    %v689 = vmin.f32 %v685, %v626
    %v690 = vmin.f32 %v686, %v627
    %v691 = vmin.f32 %v687, %v628
    %v692 = vmin.f32 %v688, %v629
    %v693 = vmin.f32 %v689, %v630
    %v694 = vmin.f32 %v692, %v693
    %v695 = vmin.f32 %v690, %v691
    %v696 = vmin.f32 %v694, %v695
    %697 = vmin.xlane.f32.xlu0 %v696
    %v698 = vpop.xlane.xlu0 %697
    %v699 = vrot.slane %v698, 4
    %v700 = vmin.f32 %v698, %v699
    %v701 = vrot.slane %v700, 2
    %v702 = vmin.f32 %v700, %v701
    %v703 = vrot.slane %v702, 1
    %v704 = vmin.f32 %v702, %v703
    %s705 = vtos %v704
    %v706 = vmax.f32 %v601, %v605
    %v707 = vmax.f32 %v602, %v606
    %v708 = vmax.f32 %v603, %v607
    %v709 = vmax.f32 %v604, %v608
    %v710 = vmax.f32 %v706, %v609
    %v711 = vmax.f32 %v707, %v610
    %v712 = vmax.f32 %v708, %v611
    %v713 = vmax.f32 %v709, %v612
    %v714 = vmax.f32 %v710, %v613
    %v715 = vmax.f32 %v711, %v614
    %v716 = vmax.f32 %v712, %v615
    %v717 = vmax.f32 %v713, %v616
    %v718 = vmax.f32 %v714, %v617
    %v719 = vmax.f32 %v715, %v618
    %v720 = vmax.f32 %v716, %v619
    %v721 = vmax.f32 %v717, %v620
    %v722 = vmax.f32 %v718, %v621
    %v723 = vmax.f32 %v719, %v622
    %v724 = vmax.f32 %v720, %v623
    %v725 = vmax.f32 %v721, %v624
    %v726 = vmax.f32 %v722, %v625
    %v727 = vmax.f32 %v723, %v626
    %v728 = vmax.f32 %v724, %v627
    %v729 = vmax.f32 %v725, %v628
    %v730 = vmax.f32 %v726, %v629
    %v731 = vmax.f32 %v727, %v630
    %v732 = vmax.f32 %v730, %v731
    %v733 = vmax.f32 %v728, %v729
    %v734 = vmax.f32 %v732, %v733
    %735 = vmax.xlane.f32.xlu0 %v734
    %v736 = vpop.xlane.xlu0 %735
    %v737 = vrot.slane %v736, 4
    %v738 = vmax.f32 %v736, %v737
    %v739 = vrot.slane %v738, 2
    %v740 = vmax.f32 %v738, %v739
    %v741 = vrot.slane %v740, 1
    %v742 = vmax.f32 %v740, %v741
    %s743 = vtos %v742
    %v744 = vstv %s705
    %v745 = vstv %s743
    %v746 = vsel %vm667, %v744, %v745
    %v747 = vstv %s666
    %v748 = vsel %vm650, %v747, %v746
    %v749 = vstv %s649
    %v750 = vsel %vm633, %v749, %v748
    %751 = vst [vmem:[%s7] sm:$0xff] %v750
    // Predicated region
    $region34: #{edge_update.2} parent=1 // pred_check
      _
    $region35: #{edge_update.2} parent=1 // pred_check_branch
      %753 = sbr.rel (0) target = $region37
    $region36: #{edge_update.2} parent=1 // pred_region
      _
    $region37: #{edge_update.2} parent=1 // pred_fallthru
      _
    // Predicated region
    $region38: #{edge_update.2} parent=1 // pred_check
      _
    $region39: #{edge_update.2} parent=1 // pred_check_branch
      %755 = sbr.rel (0) target = $region41
    $region40: #{edge_update.2} parent=1 // pred_region
      _
    $region41: #{edge_update.2} parent=1 // pred_fallthru
      _
    %756 = vsyncpa [#allocation3], 1

// kernel: edge_update.3
$region0: #{edge_update.3}
  #allocation0 [shape = 'u32[]', space=smem, size = 0x4, offset = 0x4, fixed_abs, tag = 'smem constant byte address 0x4 - core index']
  #allocation1 [shape = 'u32[72,128]{1,0:T(1,128)}', space=vmem, size = 0x9000, scoped, tag = 'internal scratch']
  %s0 = inlined_call_operand.vmem [shape: f32[12], index: 0, kind: input, shape index: {}]
  %s1 = inlined_call_operand.vmem [shape: bf16[16,128], index: 1, kind: input, shape index: {}]
  %s2 = inlined_call_operand.vmem [shape: bf16[40,384], index: 2, kind: input, shape index: {}]
  %s3 = inlined_call_operand.vmem [shape: f32[1,384], index: 3, kind: input, shape index: {}]
  %s4 = inlined_call_operand.vmem [shape: f32[1,128], index: 4, kind: input, shape index: {}]
  %s5 = inlined_call_operand.vmem [shape: bf16[64,16], index: 5, kind: input, shape index: {}]
  %s6 = inlined_call_operand.vmem [shape: bf16[16,64], index: 6, kind: input, shape index: {}]
  %s7 = inlined_call_operand.vmem [shape: bf16[80,40], index: 7, kind: input, shape index: {}]
  %s8 = inlined_call_operand.vmem [shape: bf16[16,80], index: 8, kind: input, shape index: {}]
  %s9 = inlined_call_operand.vmem [shape: f32[64,1], index: 9, kind: input, shape index: {}]
  %s10 = inlined_call_operand.vmem [shape: f32[16,1], index: 10, kind: input, shape index: {}]
  %s11 = inlined_call_operand.vmem [shape: f32[80,1], index: 11, kind: input, shape index: {}]
  %s12 = inlined_call_operand.vmem [shape: f32[16,1], index: 12, kind: input, shape index: {}]
  %s13 = inlined_call_operand.vmem [shape: f32[8,128], index: 13, kind: output, shape index: {0}]
  %s14 = inlined_call_operand.vmem [shape: f32[8,128], index: 14, kind: output, shape index: {1}]
  %s15 = inlined_call_operand.vmem [shape: f32[1,8,4], index: 15, kind: output, shape index: {2}]
  %16 = xla_tuple %s13, %s14, %s15
  %s17 = sld [smem:[#allocation0]]
  $region82: #{edge_update.3} parent=0
    _
  %s19 = ssub.s32 1, %s17
  %s20 = scalar_select 0, %s19, %s17
  $region1: #{edge_update.3} parent=0
    #allocation2 [shape = 'u8[512]{0}', space=smem, size = 0x200, scoped, tag = 'input window, operand 0, single buffered']
    #allocation3 [shape = 's32[1]{0}', space=sflag, size = 0x4, scoped, tag = 'scoped memory for edge_update.3']
    %21 = vsyncpa [#allocation3], 0
    // Predicated region
    $region2: #{edge_update.3} parent=1 // pred_check
      _
    $region3: #{edge_update.3} parent=1 // pred_check_branch
      %23 = sbr.rel (0) target = $region5
    $region4: #{edge_update.3} parent=1 // pred_region
      %25 = vsyncadd [#allocation3], 0
      %s27 = sshll.u32 %s0, 4
      %s28 = int_to_ptr.vmem [resolvable:$true] %s27
      %30 = dma.vmem_to_smem %s28, 16, [#allocation2], [#allocation3]
    $region5: #{edge_update.3} parent=1 // pred_fallthru
      _
    // Predicated region
    $region6: #{edge_update.3} parent=1 // pred_check
      _
    $region7: #{edge_update.3} parent=1 // pred_check_branch
      %32 = sbr.rel (0) target = $region9
    $region8: #{edge_update.3} parent=1 // pred_region
      _
    $region9: #{edge_update.3} parent=1 // pred_fallthru
      _
    // Predicated region
    $region10: #{edge_update.3} parent=1 // pred_check
      _
    $region11: #{edge_update.3} parent=1 // pred_check_branch
      %34 = sbr.rel (0) target = $region13
    $region12: #{edge_update.3} parent=1 // pred_region
      _
    $region13: #{edge_update.3} parent=1 // pred_fallthru
      _
    // Predicated region
    $region14: #{edge_update.3} parent=1 // pred_check
      _
    $region15: #{edge_update.3} parent=1 // pred_check_branch
      %36 = sbr.rel (0) target = $region17
    $region16: #{edge_update.3} parent=1 // pred_region
      _
    $region17: #{edge_update.3} parent=1 // pred_fallthru
      _
    // Predicated region
    $region18: #{edge_update.3} parent=1 // pred_check
      _
    $region19: #{edge_update.3} parent=1 // pred_check_branch
      %38 = sbr.rel (0) target = $region21
    $region20: #{edge_update.3} parent=1 // pred_region
      _
    $region21: #{edge_update.3} parent=1 // pred_fallthru
      _
    // Predicated region
    $region22: #{edge_update.3} parent=1 // pred_check
      _
    $region23: #{edge_update.3} parent=1 // pred_check_branch
      %40 = sbr.rel (0) target = $region25
    $region24: #{edge_update.3} parent=1 // pred_region
      _
    $region25: #{edge_update.3} parent=1 // pred_fallthru
      _
    // Predicated region
    $region26: #{edge_update.3} parent=1 // pred_check
      _
    $region27: #{edge_update.3} parent=1 // pred_check_branch
      %42 = sbr.rel (0) target = $region29
    $region28: #{edge_update.3} parent=1 // pred_region
      _
    $region29: #{edge_update.3} parent=1 // pred_fallthru
      _
    // Predicated region
    $region30: #{edge_update.3} parent=1 // pred_check
      _
    $region31: #{edge_update.3} parent=1 // pred_check_branch
      %44 = sbr.rel (0) target = $region33
    $region32: #{edge_update.3} parent=1 // pred_region
      _
    $region33: #{edge_update.3} parent=1 // pred_fallthru
      _
    // Predicated region
    $region34: #{edge_update.3} parent=1 // pred_check
      _
    $region35: #{edge_update.3} parent=1 // pred_check_branch
      %46 = sbr.rel (0) target = $region37
    $region36: #{edge_update.3} parent=1 // pred_region
      _
    $region37: #{edge_update.3} parent=1 // pred_fallthru
      _
    // Predicated region
    $region38: #{edge_update.3} parent=1 // pred_check
      _
    $region39: #{edge_update.3} parent=1 // pred_check_branch
      %48 = sbr.rel (0) target = $region41
    $region40: #{edge_update.3} parent=1 // pred_region
      _
    $region41: #{edge_update.3} parent=1 // pred_fallthru
      _
    // Predicated region
    $region42: #{edge_update.3} parent=1 // pred_check
      _
    $region43: #{edge_update.3} parent=1 // pred_check_branch
      %50 = sbr.rel (0) target = $region45
    $region44: #{edge_update.3} parent=1 // pred_region
      _
    $region45: #{edge_update.3} parent=1 // pred_fallthru
      _
    // Predicated region
    $region46: #{edge_update.3} parent=1 // pred_check
      _
    $region47: #{edge_update.3} parent=1 // pred_check_branch
      %52 = sbr.rel (0) target = $region49
    $region48: #{edge_update.3} parent=1 // pred_region
      _
    $region49: #{edge_update.3} parent=1 // pred_fallthru
      _
    // Predicated region
    $region50: #{edge_update.3} parent=1 // pred_check
      _
    $region51: #{edge_update.3} parent=1 // pred_check_branch
      %54 = sbr.rel (0) target = $region53
    $region52: #{edge_update.3} parent=1 // pred_region
      _
    $region53: #{edge_update.3} parent=1 // pred_fallthru
      _
    // Predicated region
    $region54: #{edge_update.3} parent=1 // pred_check
      _
    $region55: #{edge_update.3} parent=1 // pred_check_branch
      %56 = sbr.rel (0) target = $region57
    $region56: #{edge_update.3} parent=1 // pred_region
      %58 = dma.done [#allocation3], 16
    $region57: #{edge_update.3} parent=1 // pred_fallthru
      _
    %59 = sfence
    %s61 = sld [smem:[#allocation2]]
    %s62 = sld [smem:[#allocation2 + $0x1]]
    %s63 = sld [smem:[#allocation2 + $0x2]]
    %s64 = sld [smem:[#allocation2 + $0x3]]
    %s65 = sld [smem:[#allocation2 + $0x4]]
    %s66 = sld [smem:[#allocation2 + $0x5]]
    %s67 = sld [smem:[#allocation2 + $0x6]]
    %s68 = sld [smem:[#allocation2 + $0x7]]
    %s69 = sld [smem:[#allocation2 + $0x8]]
    %s70 = sld [smem:[#allocation2 + $0x9]]
    %s71 = sld [smem:[#allocation2 + $0xa]]
    %s72 = sld [smem:[#allocation2 + $0xb]]
    %v73 = vld [vmem:[%s4] sm:$0x1]
    %v74 = vld [vmem:[%s1] sm:$0xf]
    %v75 = vld [vmem:[%s1 + $0x4] sm:$0xf]
    %v76 = vunpack.c.l.bf16 %v74
    %v77 = vunpack.c.l.bf16 %v75
    %v78 = vld [vmem:[%s5] sm:$0xf]
    %v79 = vld [vmem:[%s5 + $0x4] sm:$0xf]
    %v80 = vld [vmem:[%s5 + $0x8] sm:$0xf]
    %v81 = vld [vmem:[%s5 + $0xc] sm:$0xf]
    %v82 = vld [vmem:[%s5 + $0x10] sm:$0xf]
    %v83 = vld [vmem:[%s5 + $0x14] sm:$0xf]
    %v84 = vld [vmem:[%s5 + $0x18] sm:$0xf]
    %v85 = vld [vmem:[%s5 + $0x1c] sm:$0xf]
    %v86 = vld [vmem:[%s9] sm:$0xff]
    %v87 = vld [vmem:[%s9 + $0x8] sm:$0xff]
    %v88 = vld [vmem:[%s9 + $0x10] sm:$0xff]
    %v89 = vld [vmem:[%s9 + $0x18] sm:$0xff]
    %v90 = vld [vmem:[%s9 + $0x20] sm:$0xff]
    %v91 = vld [vmem:[%s9 + $0x28] sm:$0xff]
    %v92 = vld [vmem:[%s9 + $0x30] sm:$0xff]
    %v93 = vld [vmem:[%s9 + $0x38] sm:$0xff]
    %v94 = vstv %s61
    %v95 = vsub.f32 %v76, %v94
    %v96 = vsub.f32 %v77, %v94
    %v97 = vstv %s62
    %v98 = vmul.f32 %v95, %v97
    %v99 = vmul.f32 %v96, %v97
    %v100 = vfloor.f32 %v98
    %v101 = vfloor.f32 %v99
    %v102 = vmax.f32 %v100, 0.0
    %v103 = vmax.f32 %v101, 0.0
    %v104 = vmin.f32 %v102, 255.0
    %v105 = vmin.f32 %v103, 255.0
    %v106 = vpack.c.bf16 %v105, %v104
    %v115 = vunpack.c.l.b16 %v78
    %v116 = vunpack.c.l.b16 %v79
    %v117 = vunpack.c.l.b16 %v80
    %v118 = vunpack.c.l.b16 %v81
    %v119 = vunpack.c.l.b16 %v82
    %v120 = vunpack.c.l.b16 %v83
    %v121 = vunpack.c.l.b16 %v84
    %v122 = vunpack.c.l.b16 %v85
    %v123 = vpack.c.b16 %v116, %v115
    %v124 = vpack.c.b16 %v118, %v117
    %v125 = vpack.c.b16 %v120, %v119
    %v126 = vpack.c.b16 %v122, %v121
    %vm127 = vcmask 130048
    %v129 = vsel %vm127, %v123, 0
    %v132 = vsel %vm127, %v124, 0
    %v135 = vsel %vm127, %v125, 0
    %v138 = vsel %vm127, %v126, 0
    %140 = vmatpush.bf16.msra.mxu0 0
    %141 = vmatpush.bf16.msra.mxu0 0
    %142 = vmatpush.bf16.msra.mxu0 0
    %143 = vmatpush.bf16.msra.mxu0 0
    %144 = vmatpush.bf16.msra.mxu0 0
    %145 = vmatpush.bf16.msra.mxu0 0
    %146 = vmatpush.bf16.msra.mxu0 0
    %147 = vmatpush.bf16.msra.mxu0 %v106
    %148 = vmatmul.bf16.gmra.mxu0 %v129
    %v149 = vpop.f32.mrf.mxu0
    %v150 = vadd.f32 0.0, %v149
    %v151 = vpop.f32.mrf.mxu0
    %v152 = vadd.f32 0.0, %v151
    %153 = vmatmul.bf16.gmra.mxu0 %v132
    %v154 = vpop.f32.mrf.mxu0
    %v155 = vadd.f32 0.0, %v154
    %v156 = vpop.f32.mrf.mxu0
    %v157 = vadd.f32 0.0, %v156
    %158 = vmatmul.bf16.gmra.mxu0 %v135
    %v159 = vpop.f32.mrf.mxu0
    %v160 = vadd.f32 0.0, %v159
    %v161 = vpop.f32.mrf.mxu0
    %v162 = vadd.f32 0.0, %v161
    %163 = vmatmul.bf16.gmra.mxu0 %v138
    %v164 = vpop.f32.mrf.mxu0
    %v165 = vadd.f32 0.0, %v164
    %v166 = vpop.f32.mrf.mxu0
    %v167 = vadd.f32 0.0, %v166
    %168 = vdwg.mxu0
    %v169 = vstv %s63
    %v170 = vmul.f32 %v150, %v169
    %v171 = vmul.f32 %v152, %v169
    %v172 = vmul.f32 %v155, %v169
    %v173 = vmul.f32 %v157, %v169
    %v174 = vmul.f32 %v160, %v169
    %v175 = vmul.f32 %v162, %v169
    %v176 = vmul.f32 %v165, %v169
    %v177 = vmul.f32 %v167, %v169
    %179 = vset.pattern.permute.xlu0 0
    %180 = vperm.xlu0 %179, %v86
    %v181 = vpop.permute.xlu0 %180
    %184 = vset.pattern.permute.xlu0 0
    %185 = vperm.xlu0 %184, %v87
    %v186 = vpop.permute.xlu0 %185
    %189 = vset.pattern.permute.xlu0 0
    %190 = vperm.xlu0 %189, %v88
    %v191 = vpop.permute.xlu0 %190
    %194 = vset.pattern.permute.xlu0 0
    %195 = vperm.xlu0 %194, %v89
    %v196 = vpop.permute.xlu0 %195
    %199 = vset.pattern.permute.xlu0 0
    %200 = vperm.xlu0 %199, %v90
    %v201 = vpop.permute.xlu0 %200
    %204 = vset.pattern.permute.xlu0 0
    %205 = vperm.xlu0 %204, %v91
    %v206 = vpop.permute.xlu0 %205
    %209 = vset.pattern.permute.xlu0 0
    %210 = vperm.xlu0 %209, %v92
    %v211 = vpop.permute.xlu0 %210
    %214 = vset.pattern.permute.xlu0 0
    %215 = vperm.xlu0 %214, %v93
    %v216 = vpop.permute.xlu0 %215
    %v218 = vadd.f32 %v170, %v181
    %v219 = vadd.f32 %v171, %v186
    %v220 = vadd.f32 %v172, %v191
    %v221 = vadd.f32 %v173, %v196
    %v222 = vadd.f32 %v174, %v201
    %v223 = vadd.f32 %v175, %v206
    %v224 = vadd.f32 %v176, %v211
    %v225 = vadd.f32 %v177, %v216
    %v226 = vmax.f32 %v218, 0.0
    %v227 = vmax.f32 %v219, 0.0
    %v228 = vmax.f32 %v220, 0.0
    %v229 = vmax.f32 %v221, 0.0
    %v230 = vmax.f32 %v222, 0.0
    %v231 = vmax.f32 %v223, 0.0
    %v232 = vmax.f32 %v224, 0.0
    %v233 = vmax.f32 %v225, 0.0
    %v234 = vld [vmem:[%s6] sm:$0xf]
    %v235 = vld [vmem:[%s6 + $0x4] sm:$0xf]
    %v236 = vld [vmem:[%s10] sm:$0xff]
    %v237 = vld [vmem:[%s10 + $0x8] sm:$0xff]
    %v238 = vstv %s67
    %v239 = vsub.f32 %v226, %v238
    %v240 = vsub.f32 %v227, %v238
    %v241 = vsub.f32 %v228, %v238
    %v242 = vsub.f32 %v229, %v238
    %v243 = vsub.f32 %v230, %v238
    %v244 = vsub.f32 %v231, %v238
    %v245 = vsub.f32 %v232, %v238
    %v246 = vsub.f32 %v233, %v238
    %v247 = vstv %s68
    %v248 = vmul.f32 %v239, %v247
    %v249 = vmul.f32 %v240, %v247
    %v250 = vmul.f32 %v241, %v247
    %v251 = vmul.f32 %v242, %v247
    %v252 = vmul.f32 %v243, %v247
    %v253 = vmul.f32 %v244, %v247
    %v254 = vmul.f32 %v245, %v247
    %v255 = vmul.f32 %v246, %v247
    %v256 = vfloor.f32 %v248
    %v257 = vfloor.f32 %v249
    %v258 = vfloor.f32 %v250
    %v259 = vfloor.f32 %v251
    %v260 = vfloor.f32 %v252
    %v261 = vfloor.f32 %v253
    %v262 = vfloor.f32 %v254
    %v263 = vfloor.f32 %v255
    %v264 = vmax.f32 %v256, 0.0
    %v265 = vmax.f32 %v257, 0.0
    %v266 = vmax.f32 %v258, 0.0
    %v267 = vmax.f32 %v259, 0.0
    %v268 = vmax.f32 %v260, 0.0
    %v269 = vmax.f32 %v261, 0.0
    %v270 = vmax.f32 %v262, 0.0
    %v271 = vmax.f32 %v263, 0.0
    %v272 = vmin.f32 %v264, 255.0
    %v273 = vmin.f32 %v265, 255.0
    %v274 = vmin.f32 %v266, 255.0
    %v275 = vmin.f32 %v267, 255.0
    %v276 = vmin.f32 %v268, 255.0
    %v277 = vmin.f32 %v269, 255.0
    %v278 = vmin.f32 %v270, 255.0
    %v279 = vmin.f32 %v271, 255.0
    %v280 = vpack.c.bf16 %v273, %v272
    %v281 = vpack.c.bf16 %v275, %v274
    %v282 = vpack.c.bf16 %v277, %v276
    %v283 = vpack.c.bf16 %v279, %v278
    %v286 = vunpack.c.l.b16 %v234
    %v287 = vunpack.c.l.b16 %v235
    %v288 = vpack.c.b16 %v287, %v286
    %vm289 = vcmask 523264
    %v291 = vsel %vm289, %v288, 0
    %293 = vmatpush.bf16.msra.mxu0 0
    %294 = vmatpush.bf16.msra.mxu0 0
    %295 = vmatpush.bf16.msra.mxu0 0
    %296 = vmatpush.bf16.msra.mxu0 0
    %297 = vmatpush.bf16.msra.mxu0 %v283
    %298 = vmatpush.bf16.msra.mxu0 %v282
    %299 = vmatpush.bf16.msra.mxu0 %v281
    %300 = vmatpush.bf16.msra.mxu0 %v280
    %301 = vmatmul.bf16.gmra.mxu0 %v291
    %v302 = vpop.f32.mrf.mxu0
    %v303 = vadd.f32 0.0, %v302
    %v304 = vpop.f32.mrf.mxu0
    %v305 = vadd.f32 0.0, %v304
    %306 = vdwg.mxu0
    %v307 = vstv %s69
    %v308 = vmul.f32 %v303, %v307
    %v309 = vmul.f32 %v305, %v307
    %311 = vset.pattern.permute.xlu0 0
    %312 = vperm.xlu0 %311, %v236
    %v313 = vpop.permute.xlu0 %312
    %316 = vset.pattern.permute.xlu0 0
    %317 = vperm.xlu0 %316, %v237
    %v318 = vpop.permute.xlu0 %317
    %v320 = vadd.f32 %v308, %v313
    %v321 = vadd.f32 %v309, %v318
    %v322 = vxor.u32 %v320, 2147483648
    %v323 = vmul.f32 %v322, 1.442695
    %v324 = vpow.pop %v323
    %v325 = vadd.f32 %v324, 1.0
    %v326 = vrcp.pop %v325
    %v327 = vmul.f32 %v325, %v326
    %v328 = vsub.f32 1.0, %v327
    %v329 = vmul.f32 %v326, %v328
    %v330 = vadd.f32 %v326, %v329
    %vm331 = vweird.f32 %v325
    %vm332 = vweird.f32 %v326
    %vm333 = vmor %vm331, %vm332
    %v334 = vsel %vm333, %v326, %v330
    %v335 = vand.u32 2147483647, %v325
    %vm336 = vcmp.eq.f32.partialorder %v335, 8.507059e+37
    %v337 = vand.u32 %v325, 2147483648
    %v338 = vor.u32 1.1754944e-38, %v337
    %v339 = vsel %vm336, %v338, %v334
    %v340 = vmul.f32 1.0, %v339
    %v341 = vtanh.pop %v321
    %v342 = vmul.f32 %v340, %v341
    %v344 = vperm.slane %v73, 0
    %v346 = vmul.f32 %v342, %v344
    %347 = vst [vmem:[%s13] sm:$0xff] %v346
    %v348 = vld [vmem:[%s2] sm:$0xff]
    %v349 = vld [vmem:[%s2 + $0x8] sm:$0xf]
    %v350 = vld [vmem:[%s2 + $0xc] sm:$0xff]
    %v351 = vld [vmem:[%s2 + $0x14] sm:$0xf]
    %v352 = vld [vmem:[%s2 + $0x18] sm:$0xff]
    %v353 = vld [vmem:[%s2 + $0x20] sm:$0xf]
    %v354 = vld [vmem:[%s2 + $0x24] sm:$0xff]
    %v355 = vld [vmem:[%s2 + $0x2c] sm:$0xf]
    %v356 = vld [vmem:[%s2 + $0x30] sm:$0xff]
    %v357 = vld [vmem:[%s2 + $0x38] sm:$0xf]
    %v358 = vunpack.c.l.bf16 %v348
    %v359 = vunpack.c.h.bf16 %v348
    %v360 = vunpack.c.l.bf16 %v349
    %v361 = vunpack.c.l.bf16 %v350
    %v362 = vunpack.c.h.bf16 %v350
    %v363 = vunpack.c.l.bf16 %v351
    %v364 = vunpack.c.l.bf16 %v352
    %v365 = vunpack.c.h.bf16 %v352
    %v366 = vunpack.c.l.bf16 %v353
    %v367 = vunpack.c.l.bf16 %v354
    %v368 = vunpack.c.h.bf16 %v354
    %v369 = vunpack.c.l.bf16 %v355
    %v370 = vunpack.c.l.bf16 %v356
    %v371 = vunpack.c.h.bf16 %v356
    %v372 = vunpack.c.l.bf16 %v357
    %v373 = vld [vmem:[%s7] sm:$0xf]
    %v374 = vld [vmem:[%s7 + $0x4] sm:$0xf]
    %v375 = vld [vmem:[%s7 + $0x8] sm:$0xf]
    %v376 = vld [vmem:[%s7 + $0xc] sm:$0xf]
    %v377 = vld [vmem:[%s7 + $0x10] sm:$0xf]
    %v378 = vld [vmem:[%s7 + $0x14] sm:$0xf]
    %v379 = vld [vmem:[%s7 + $0x18] sm:$0xf]
    %v380 = vld [vmem:[%s7 + $0x1c] sm:$0xf]
    %v381 = vld [vmem:[%s7 + $0x20] sm:$0xf]
    %v382 = vld [vmem:[%s7 + $0x24] sm:$0xf]
    %v383 = vld [vmem:[%s11] sm:$0xff]
    %v384 = vld [vmem:[%s11 + $0x8] sm:$0xff]
    %v385 = vld [vmem:[%s11 + $0x10] sm:$0xff]
    %v386 = vld [vmem:[%s11 + $0x18] sm:$0xff]
    %v387 = vld [vmem:[%s11 + $0x20] sm:$0xff]
    %v388 = vld [vmem:[%s11 + $0x28] sm:$0xff]
    %v389 = vld [vmem:[%s11 + $0x30] sm:$0xff]
    %v390 = vld [vmem:[%s11 + $0x38] sm:$0xff]
    %v391 = vld [vmem:[%s11 + $0x40] sm:$0xff]
    %v392 = vld [vmem:[%s11 + $0x48] sm:$0xff]
    %v393 = vstv %s64
    %v394 = vsub.f32 %v358, %v393
    %v395 = vsub.f32 %v359, %v393
    %v396 = vsub.f32 %v360, %v393
    %v397 = vsub.f32 %v361, %v393
    %v398 = vsub.f32 %v362, %v393
    %v399 = vsub.f32 %v363, %v393
    %v400 = vsub.f32 %v364, %v393
    %v401 = vsub.f32 %v365, %v393
    %v402 = vsub.f32 %v366, %v393
    %v403 = vsub.f32 %v367, %v393
    %v404 = vsub.f32 %v368, %v393
    %v405 = vsub.f32 %v369, %v393
    %v406 = vsub.f32 %v370, %v393
    %v407 = vsub.f32 %v371, %v393
    %v408 = vsub.f32 %v372, %v393
    %v409 = vstv %s65
    %v410 = vmul.f32 %v394, %v409
    %v411 = vmul.f32 %v395, %v409
    %v412 = vmul.f32 %v396, %v409
    %v413 = vmul.f32 %v397, %v409
    %v414 = vmul.f32 %v398, %v409
    %v415 = vmul.f32 %v399, %v409
    %v416 = vmul.f32 %v400, %v409
    %v417 = vmul.f32 %v401, %v409
    %v418 = vmul.f32 %v402, %v409
    %v419 = vmul.f32 %v403, %v409
    %v420 = vmul.f32 %v404, %v409
    %v421 = vmul.f32 %v405, %v409
    %v422 = vmul.f32 %v406, %v409
    %v423 = vmul.f32 %v407, %v409
    %v424 = vmul.f32 %v408, %v409
    %v425 = vfloor.f32 %v410
    %v426 = vfloor.f32 %v411
    %v427 = vfloor.f32 %v412
    %v428 = vfloor.f32 %v413
    %v429 = vfloor.f32 %v414
    %v430 = vfloor.f32 %v415
    %v431 = vfloor.f32 %v416
    %v432 = vfloor.f32 %v417
    %v433 = vfloor.f32 %v418
    %v434 = vfloor.f32 %v419
    %v435 = vfloor.f32 %v420
    %v436 = vfloor.f32 %v421
    %v437 = vfloor.f32 %v422
    %v438 = vfloor.f32 %v423
    %v439 = vfloor.f32 %v424
    %v440 = vmax.f32 %v425, 0.0
    %v441 = vmax.f32 %v426, 0.0
    %v442 = vmax.f32 %v427, 0.0
    %v443 = vmax.f32 %v428, 0.0
    %v444 = vmax.f32 %v429, 0.0
    %v445 = vmax.f32 %v430, 0.0
    %v446 = vmax.f32 %v431, 0.0
    %v447 = vmax.f32 %v432, 0.0
    %v448 = vmax.f32 %v433, 0.0
    %v449 = vmax.f32 %v434, 0.0
    %v450 = vmax.f32 %v435, 0.0
    %v451 = vmax.f32 %v436, 0.0
    %v452 = vmax.f32 %v437, 0.0
    %v453 = vmax.f32 %v438, 0.0
    %v454 = vmax.f32 %v439, 0.0
    %v455 = vmin.f32 %v440, 255.0
    %v456 = vmin.f32 %v441, 255.0
    %v457 = vmin.f32 %v442, 255.0
    %v458 = vmin.f32 %v443, 255.0
    %v459 = vmin.f32 %v444, 255.0
    %v460 = vmin.f32 %v445, 255.0
    %v461 = vmin.f32 %v446, 255.0
    %v462 = vmin.f32 %v447, 255.0
    %v463 = vmin.f32 %v448, 255.0
    %v464 = vmin.f32 %v449, 255.0
    %v465 = vmin.f32 %v450, 255.0
    %v466 = vmin.f32 %v451, 255.0
    %v467 = vmin.f32 %v452, 255.0
    %v468 = vmin.f32 %v453, 255.0
    %v469 = vmin.f32 %v454, 255.0
    %v470 = vpack.c.bf16 %v458, %v455
    %v471 = vpack.c.bf16 %v459, %v456
    %v472 = vpack.c.bf16 %v460, %v457
    %v473 = vpack.c.bf16 %v464, %v461
    %v474 = vpack.c.bf16 %v465, %v462
    %v475 = vpack.c.bf16 %v466, %v463
    %v476 = vpack.c.bf16 %v467, %v467
    %v477 = vpack.c.bf16 %v468, %v468
    %v478 = vpack.c.bf16 %v469, %v469
    %v489 = vunpack.c.l.b16 %v373
    %v490 = vunpack.c.l.b16 %v374
    %v491 = vunpack.c.l.b16 %v375
    %v492 = vunpack.c.l.b16 %v376
    %v493 = vunpack.c.l.b16 %v377
    %v494 = vunpack.c.l.b16 %v378
    %v495 = vunpack.c.l.b16 %v379
    %v496 = vunpack.c.l.b16 %v380
    %v497 = vunpack.c.l.b16 %v381
    %v498 = vunpack.c.l.b16 %v382
    %v499 = vpack.c.b16 %v490, %v489
    %v500 = vpack.c.b16 %v492, %v491
    %v501 = vpack.c.b16 %v494, %v493
    %v502 = vpack.c.b16 %v496, %v495
    %v503 = vpack.c.b16 %v498, %v497
    %vm504 = vcmask 326656
    %v506 = vsel %vm504, %v499, 0
    %v509 = vsel %vm504, %v500, 0
    %v512 = vsel %vm504, %v501, 0
    %v515 = vsel %vm504, %v502, 0
    %v518 = vsel %vm504, %v503, 0
    %vm520 = vcmask 1043456
    %v522 = vsel %vm520, %v476, 0
    %v525 = vsel %vm520, %v477, 0
    %v528 = vsel %vm520, %v478, 0
    %530 = vmatpush.bf16.msra.mxu0 0
    %531 = vmatpush.bf16.msra.mxu0 0
    %532 = vmatpush.bf16.msra.mxu0 0
    %533 = vmatpush.bf16.msra.mxu0 0
    %534 = vmatpush.bf16.msra.mxu0 0
    %535 = vmatpush.bf16.msra.mxu0 %v522
    %536 = vmatpush.bf16.msra.mxu0 %v473
    %537 = vmatpush.bf16.msra.mxu0 %v470
    %538 = vmatmul.bf16.gmra.mxu0 %v506
    %v539 = vpop.f32.mrf.mxu0
    %v540 = vadd.f32 0.0, %v539
    %v541 = vpop.f32.mrf.mxu0
    %v542 = vadd.f32 0.0, %v541
    %543 = vmatmul.bf16.gmra.mxu0 %v509
    %v544 = vpop.f32.mrf.mxu0
    %v545 = vadd.f32 0.0, %v544
    %v546 = vpop.f32.mrf.mxu0
    %v547 = vadd.f32 0.0, %v546
    %548 = vmatmul.bf16.gmra.mxu0 %v512
    %v549 = vpop.f32.mrf.mxu0
    %v550 = vadd.f32 0.0, %v549
    %v551 = vpop.f32.mrf.mxu0
    %v552 = vadd.f32 0.0, %v551
    %553 = vmatmul.bf16.gmra.mxu0 %v515
    %v554 = vpop.f32.mrf.mxu0
    %v555 = vadd.f32 0.0, %v554
    %v556 = vpop.f32.mrf.mxu0
    %v557 = vadd.f32 0.0, %v556
    %558 = vmatmul.bf16.gmra.mxu0 %v518
    %v559 = vpop.f32.mrf.mxu0
    %v560 = vadd.f32 0.0, %v559
    %v561 = vpop.f32.mrf.mxu0
    %v562 = vadd.f32 0.0, %v561
    %563 = vdwg.mxu0
    %564 = vmatpush.bf16.msra.mxu0 0
    %565 = vmatpush.bf16.msra.mxu0 0
    %566 = vmatpush.bf16.msra.mxu0 0
    %567 = vmatpush.bf16.msra.mxu0 0
    %568 = vmatpush.bf16.msra.mxu0 0
    %569 = vmatpush.bf16.msra.mxu0 %v525
    %570 = vmatpush.bf16.msra.mxu0 %v474
    %571 = vmatpush.bf16.msra.mxu0 %v471
    %572 = vmatmul.bf16.gmra.mxu0 %v506
    %v573 = vpop.f32.mrf.mxu0
    %v574 = vadd.f32 0.0, %v573
    %v575 = vpop.f32.mrf.mxu0
    %v576 = vadd.f32 0.0, %v575
    %577 = vmatmul.bf16.gmra.mxu0 %v509
    %v578 = vpop.f32.mrf.mxu0
    %v579 = vadd.f32 0.0, %v578
    %v580 = vpop.f32.mrf.mxu0
    %v581 = vadd.f32 0.0, %v580
    %582 = vmatmul.bf16.gmra.mxu0 %v512
    %v583 = vpop.f32.mrf.mxu0
    %v584 = vadd.f32 0.0, %v583
    %v585 = vpop.f32.mrf.mxu0
    %v586 = vadd.f32 0.0, %v585
    %587 = vmatmul.bf16.gmra.mxu0 %v515
    %v588 = vpop.f32.mrf.mxu0
    %v589 = vadd.f32 0.0, %v588
    %v590 = vpop.f32.mrf.mxu0
    %v591 = vadd.f32 0.0, %v590
    %592 = vmatmul.bf16.gmra.mxu0 %v518
    %v593 = vpop.f32.mrf.mxu0
    %v594 = vadd.f32 0.0, %v593
    %v595 = vpop.f32.mrf.mxu0
    %v596 = vadd.f32 0.0, %v595
    %597 = vdwg.mxu0
    %598 = vmatpush.bf16.msra.mxu0 0
    %599 = vmatpush.bf16.msra.mxu0 0
    %600 = vmatpush.bf16.msra.mxu0 0
    %601 = vmatpush.bf16.msra.mxu0 0
    %602 = vmatpush.bf16.msra.mxu0 0
    %603 = vmatpush.bf16.msra.mxu0 %v528
    %604 = vmatpush.bf16.msra.mxu0 %v475
    %605 = vmatpush.bf16.msra.mxu0 %v472
    %606 = vmatmul.bf16.gmra.mxu0 %v506
    %v607 = vpop.f32.mrf.mxu0
    %v608 = vadd.f32 0.0, %v607
    %v609 = vpop.f32.mrf.mxu0
    %v610 = vadd.f32 0.0, %v609
    %611 = vmatmul.bf16.gmra.mxu0 %v509
    %v612 = vpop.f32.mrf.mxu0
    %v613 = vadd.f32 0.0, %v612
    %v614 = vpop.f32.mrf.mxu0
    %v615 = vadd.f32 0.0, %v614
    %616 = vmatmul.bf16.gmra.mxu0 %v512
    %v617 = vpop.f32.mrf.mxu0
    %v618 = vadd.f32 0.0, %v617
    %v619 = vpop.f32.mrf.mxu0
    %v620 = vadd.f32 0.0, %v619
    %621 = vmatmul.bf16.gmra.mxu0 %v515
    %v622 = vpop.f32.mrf.mxu0
    %v623 = vadd.f32 0.0, %v622
    %v624 = vpop.f32.mrf.mxu0
    %v625 = vadd.f32 0.0, %v624
    %626 = vmatmul.bf16.gmra.mxu0 %v518
    %v627 = vpop.f32.mrf.mxu0
    %v628 = vadd.f32 0.0, %v627
    %v629 = vpop.f32.mrf.mxu0
    %v630 = vadd.f32 0.0, %v629
    %631 = vdwg.mxu0
    %v632 = vstv %s66
    %v633 = vmul.f32 %v540, %v632
    %v634 = vmul.f32 %v574, %v632
    %v635 = vmul.f32 %v608, %v632
    %v636 = vmul.f32 %v542, %v632
    %v637 = vmul.f32 %v576, %v632
    %v638 = vmul.f32 %v610, %v632
    %v639 = vmul.f32 %v545, %v632
    %v640 = vmul.f32 %v579, %v632
    %v641 = vmul.f32 %v613, %v632
    %v642 = vmul.f32 %v547, %v632
    %v643 = vmul.f32 %v581, %v632
    %v644 = vmul.f32 %v615, %v632
    %v645 = vmul.f32 %v550, %v632
    %v646 = vmul.f32 %v584, %v632
    %v647 = vmul.f32 %v618, %v632
    %v648 = vmul.f32 %v552, %v632
    %v649 = vmul.f32 %v586, %v632
    %v650 = vmul.f32 %v620, %v632
    %v651 = vmul.f32 %v555, %v632
    %v652 = vmul.f32 %v589, %v632
    %v653 = vmul.f32 %v623, %v632
    %v654 = vmul.f32 %v557, %v632
    %v655 = vmul.f32 %v591, %v632
    %v656 = vmul.f32 %v625, %v632
    %v657 = vmul.f32 %v560, %v632
    %v658 = vmul.f32 %v594, %v632
    %v659 = vmul.f32 %v628, %v632
    %v660 = vmul.f32 %v562, %v632
    %v661 = vmul.f32 %v596, %v632
    %v662 = vmul.f32 %v630, %v632
    %664 = vset.pattern.permute.xlu0 0
    %665 = vperm.xlu0 %664, %v383
    %v666 = vpop.permute.xlu0 %665
    %669 = vset.pattern.permute.xlu0 0
    %670 = vperm.xlu0 %669, %v384
    %v671 = vpop.permute.xlu0 %670
    %674 = vset.pattern.permute.xlu0 0
    %675 = vperm.xlu0 %674, %v385
    %v676 = vpop.permute.xlu0 %675
    %679 = vset.pattern.permute.xlu0 0
    %680 = vperm.xlu0 %679, %v386
    %v681 = vpop.permute.xlu0 %680
    %684 = vset.pattern.permute.xlu0 0
    %685 = vperm.xlu0 %684, %v387
    %v686 = vpop.permute.xlu0 %685
    %689 = vset.pattern.permute.xlu0 0
    %690 = vperm.xlu0 %689, %v388
    %v691 = vpop.permute.xlu0 %690
    %694 = vset.pattern.permute.xlu0 0
    %695 = vperm.xlu0 %694, %v389
    %v696 = vpop.permute.xlu0 %695
    %699 = vset.pattern.permute.xlu0 0
    %700 = vperm.xlu0 %699, %v390
    %v701 = vpop.permute.xlu0 %700
    %704 = vset.pattern.permute.xlu0 0
    %705 = vperm.xlu0 %704, %v391
    %v706 = vpop.permute.xlu0 %705
    %709 = vset.pattern.permute.xlu0 0
    %710 = vperm.xlu0 %709, %v392
    %v711 = vpop.permute.xlu0 %710
    %v713 = vadd.f32 %v633, %v666
    %v714 = vadd.f32 %v634, %v666
    %v715 = vadd.f32 %v635, %v666
    %v716 = vadd.f32 %v636, %v671
    %v717 = vadd.f32 %v637, %v671
    %v718 = vadd.f32 %v638, %v671
    %v719 = vadd.f32 %v639, %v676
    %v720 = vadd.f32 %v640, %v676
    %v721 = vadd.f32 %v641, %v676
    %v722 = vadd.f32 %v642, %v681
    %v723 = vadd.f32 %v643, %v681
    %v724 = vadd.f32 %v644, %v681
    %v725 = vadd.f32 %v645, %v686
    %v726 = vadd.f32 %v646, %v686
    %v727 = vadd.f32 %v647, %v686
    %v728 = vadd.f32 %v648, %v691
    %v729 = vadd.f32 %v649, %v691
    %v730 = vadd.f32 %v650, %v691
    %v731 = vadd.f32 %v651, %v696
    %v732 = vadd.f32 %v652, %v696
    %v733 = vadd.f32 %v653, %v696
    %v734 = vadd.f32 %v654, %v701
    %v735 = vadd.f32 %v655, %v701
    %v736 = vadd.f32 %v656, %v701
    %v737 = vadd.f32 %v657, %v706
    %v738 = vadd.f32 %v658, %v706
    %v739 = vadd.f32 %v659, %v706
    %v740 = vadd.f32 %v660, %v711
    %v741 = vadd.f32 %v661, %v711
    %v742 = vadd.f32 %v662, %v711
    %v743 = vmax.f32 %v713, 0.0
    %v744 = vmax.f32 %v714, 0.0
    %v745 = vmax.f32 %v715, 0.0
    %v746 = vmax.f32 %v716, 0.0
    %v747 = vmax.f32 %v717, 0.0
    %v748 = vmax.f32 %v718, 0.0
    %v749 = vmax.f32 %v719, 0.0
    %v750 = vmax.f32 %v720, 0.0
    %v751 = vmax.f32 %v721, 0.0
    %v752 = vmax.f32 %v722, 0.0
    %v753 = vmax.f32 %v723, 0.0
    %v754 = vmax.f32 %v724, 0.0
    %v755 = vmax.f32 %v725, 0.0
    %v756 = vmax.f32 %v726, 0.0
    %v757 = vmax.f32 %v727, 0.0
    %v758 = vmax.f32 %v728, 0.0
    %v759 = vmax.f32 %v729, 0.0
    %v760 = vmax.f32 %v730, 0.0
    %v761 = vmax.f32 %v731, 0.0
    %v762 = vmax.f32 %v732, 0.0
    %v763 = vmax.f32 %v733, 0.0
    %v764 = vmax.f32 %v734, 0.0
    %v765 = vmax.f32 %v735, 0.0
    %v766 = vmax.f32 %v736, 0.0
    %v767 = vmax.f32 %v737, 0.0
    %v768 = vmax.f32 %v738, 0.0
    %v769 = vmax.f32 %v739, 0.0
    %v770 = vmax.f32 %v740, 0.0
    %v771 = vmax.f32 %v741, 0.0
    %v772 = vmax.f32 %v742, 0.0
    %v773 = vld [vmem:[%s8] sm:$0xf]
    %v774 = vld [vmem:[%s8 + $0x4] sm:$0xf]
    %v775 = vld [vmem:[%s12] sm:$0xff]
    %v776 = vld [vmem:[%s12 + $0x8] sm:$0xff]
    %v777 = vstv %s70
    %v778 = vsub.f32 %v743, %v777
    %v779 = vsub.f32 %v744, %v777
    %v780 = vsub.f32 %v745, %v777
    %v781 = vsub.f32 %v746, %v777
    %v782 = vsub.f32 %v747, %v777
    %v783 = vsub.f32 %v748, %v777
    %v784 = vsub.f32 %v749, %v777
    %v785 = vsub.f32 %v750, %v777
    %v786 = vsub.f32 %v751, %v777
    %v787 = vsub.f32 %v752, %v777
    %v788 = vsub.f32 %v753, %v777
    %v789 = vsub.f32 %v754, %v777
    %v790 = vsub.f32 %v755, %v777
    %v791 = vsub.f32 %v756, %v777
    %v792 = vsub.f32 %v757, %v777
    %v793 = vsub.f32 %v758, %v777
    %v794 = vsub.f32 %v759, %v777
    %v795 = vsub.f32 %v760, %v777
    %v796 = vsub.f32 %v761, %v777
    %v797 = vsub.f32 %v762, %v777
    %v798 = vsub.f32 %v763, %v777
    %v799 = vsub.f32 %v764, %v777
    %v800 = vsub.f32 %v765, %v777
    %v801 = vsub.f32 %v766, %v777
    %v802 = vsub.f32 %v767, %v777
    %v803 = vsub.f32 %v768, %v777
    %v804 = vsub.f32 %v769, %v777
    %v805 = vsub.f32 %v770, %v777
    %v806 = vsub.f32 %v771, %v777
    %v807 = vsub.f32 %v772, %v777
    %v808 = vstv %s71
    %v809 = vmul.f32 %v778, %v808
    %v810 = vmul.f32 %v779, %v808
    %v811 = vmul.f32 %v780, %v808
    %v812 = vmul.f32 %v781, %v808
    %v813 = vmul.f32 %v782, %v808
    %v814 = vmul.f32 %v783, %v808
    %v815 = vmul.f32 %v784, %v808
    %v816 = vmul.f32 %v785, %v808
    %v817 = vmul.f32 %v786, %v808
    %v818 = vmul.f32 %v787, %v808
    %v819 = vmul.f32 %v788, %v808
    %v820 = vmul.f32 %v789, %v808
    %v821 = vmul.f32 %v790, %v808
    %v822 = vmul.f32 %v791, %v808
    %v823 = vmul.f32 %v792, %v808
    %v824 = vmul.f32 %v793, %v808
    %v825 = vmul.f32 %v794, %v808
    %v826 = vmul.f32 %v795, %v808
    %v827 = vmul.f32 %v796, %v808
    %v828 = vmul.f32 %v797, %v808
    %v829 = vmul.f32 %v798, %v808
    %v830 = vmul.f32 %v799, %v808
    %v831 = vmul.f32 %v800, %v808
    %v832 = vmul.f32 %v801, %v808
    %v833 = vmul.f32 %v802, %v808
    %v834 = vmul.f32 %v803, %v808
    %v835 = vmul.f32 %v804, %v808
    %v836 = vmul.f32 %v805, %v808
    %v837 = vmul.f32 %v806, %v808
    %v838 = vmul.f32 %v807, %v808
    %v839 = vfloor.f32 %v809
    %v840 = vfloor.f32 %v810
    %v841 = vfloor.f32 %v811
    %v842 = vfloor.f32 %v812
    %v843 = vfloor.f32 %v813
    %v844 = vfloor.f32 %v814
    %v845 = vfloor.f32 %v815
    %v846 = vfloor.f32 %v816
    %v847 = vfloor.f32 %v817
    %v848 = vfloor.f32 %v818
    %v849 = vfloor.f32 %v819
    %v850 = vfloor.f32 %v820
    %v851 = vfloor.f32 %v821
    %v852 = vfloor.f32 %v822
    %v853 = vfloor.f32 %v823
    %v854 = vfloor.f32 %v824
    %v855 = vfloor.f32 %v825
    %v856 = vfloor.f32 %v826
    %v857 = vfloor.f32 %v827
    %v858 = vfloor.f32 %v828
    %v859 = vfloor.f32 %v829
    %v860 = vfloor.f32 %v830
    %v861 = vfloor.f32 %v831
    %v862 = vfloor.f32 %v832
    %v863 = vfloor.f32 %v833
    %v864 = vfloor.f32 %v834
    %v865 = vfloor.f32 %v835
    %v866 = vfloor.f32 %v836
    %v867 = vfloor.f32 %v837
    %v868 = vfloor.f32 %v838
    %v869 = vmax.f32 %v839, 0.0
    %v870 = vmax.f32 %v840, 0.0
    %v871 = vmax.f32 %v841, 0.0
    %v872 = vmax.f32 %v842, 0.0
    %v873 = vmax.f32 %v843, 0.0
    %v874 = vmax.f32 %v844, 0.0
    %v875 = vmax.f32 %v845, 0.0
    %v876 = vmax.f32 %v846, 0.0
    %v877 = vmax.f32 %v847, 0.0
    %v878 = vmax.f32 %v848, 0.0
    %v879 = vmax.f32 %v849, 0.0
    %v880 = vmax.f32 %v850, 0.0
    %v881 = vmax.f32 %v851, 0.0
    %v882 = vmax.f32 %v852, 0.0
    %v883 = vmax.f32 %v853, 0.0
    %v884 = vmax.f32 %v854, 0.0
    %v885 = vmax.f32 %v855, 0.0
    %v886 = vmax.f32 %v856, 0.0
    %v887 = vmax.f32 %v857, 0.0
    %v888 = vmax.f32 %v858, 0.0
    %v889 = vmax.f32 %v859, 0.0
    %v890 = vmax.f32 %v860, 0.0
    %v891 = vmax.f32 %v861, 0.0
    %v892 = vmax.f32 %v862, 0.0
    %v893 = vmax.f32 %v863, 0.0
    %v894 = vmax.f32 %v864, 0.0
    %v895 = vmax.f32 %v865, 0.0
    %v896 = vmax.f32 %v866, 0.0
    %v897 = vmax.f32 %v867, 0.0
    %v898 = vmax.f32 %v868, 0.0
    %v899 = vmin.f32 %v869, 255.0
    %v900 = vmin.f32 %v870, 255.0
    %v901 = vmin.f32 %v871, 255.0
    %v902 = vmin.f32 %v872, 255.0
    %v903 = vmin.f32 %v873, 255.0
    %v904 = vmin.f32 %v874, 255.0
    %v905 = vmin.f32 %v875, 255.0
    %v906 = vmin.f32 %v876, 255.0
    %v907 = vmin.f32 %v877, 255.0
    %v908 = vmin.f32 %v878, 255.0
    %v909 = vmin.f32 %v879, 255.0
    %v910 = vmin.f32 %v880, 255.0
    %v911 = vmin.f32 %v881, 255.0
    %v912 = vmin.f32 %v882, 255.0
    %v913 = vmin.f32 %v883, 255.0
    %v914 = vmin.f32 %v884, 255.0
    %v915 = vmin.f32 %v885, 255.0
    %v916 = vmin.f32 %v886, 255.0
    %v917 = vmin.f32 %v887, 255.0
    %v918 = vmin.f32 %v888, 255.0
    %v919 = vmin.f32 %v889, 255.0
    %v920 = vmin.f32 %v890, 255.0
    %v921 = vmin.f32 %v891, 255.0
    %v922 = vmin.f32 %v892, 255.0
    %v923 = vmin.f32 %v893, 255.0
    %v924 = vmin.f32 %v894, 255.0
    %v925 = vmin.f32 %v895, 255.0
    %v926 = vmin.f32 %v896, 255.0
    %v927 = vmin.f32 %v897, 255.0
    %v928 = vmin.f32 %v898, 255.0
    %v929 = vpack.c.bf16 %v902, %v899
    %v930 = vpack.c.bf16 %v903, %v900
    %v931 = vpack.c.bf16 %v904, %v901
    %v932 = vpack.c.bf16 %v908, %v905
    %v933 = vpack.c.bf16 %v909, %v906
    %v934 = vpack.c.bf16 %v910, %v907
    %v935 = vpack.c.bf16 %v914, %v911
    %v936 = vpack.c.bf16 %v915, %v912
    %v937 = vpack.c.bf16 %v916, %v913
    %v938 = vpack.c.bf16 %v920, %v917
    %v939 = vpack.c.bf16 %v921, %v918
    %v940 = vpack.c.bf16 %v922, %v919
    %v941 = vpack.c.bf16 %v926, %v923
    %v942 = vpack.c.bf16 %v927, %v924
    %v943 = vpack.c.bf16 %v928, %v925
    %v946 = vunpack.c.l.b16 %v773
    %v947 = vunpack.c.l.b16 %v774
    %v948 = vpack.c.b16 %v947, %v946
    %vm949 = vcmask 654336
    %v951 = vsel %vm949, %v948, 0
    %953 = vmatpush.bf16.msra.mxu0 0
    %954 = vmatpush.bf16.msra.mxu0 0
    %955 = vmatpush.bf16.msra.mxu0 0
    %956 = vmatpush.bf16.msra.mxu0 %v941
    %957 = vmatpush.bf16.msra.mxu0 %v938
    %958 = vmatpush.bf16.msra.mxu0 %v935
    %959 = vmatpush.bf16.msra.mxu0 %v932
    %960 = vmatpush.bf16.msra.mxu0 %v929
    %961 = vmatmul.bf16.gmra.mxu0 %v951
    %v962 = vpop.f32.mrf.mxu0
    %v963 = vadd.f32 0.0, %v962
    %v964 = vpop.f32.mrf.mxu0
    %v965 = vadd.f32 0.0, %v964
    %966 = vdwg.mxu0
    %967 = vmatpush.bf16.msra.mxu0 0
    %968 = vmatpush.bf16.msra.mxu0 0
    %969 = vmatpush.bf16.msra.mxu0 0
    %970 = vmatpush.bf16.msra.mxu0 %v942
    %971 = vmatpush.bf16.msra.mxu0 %v939
    %972 = vmatpush.bf16.msra.mxu0 %v936
    %973 = vmatpush.bf16.msra.mxu0 %v933
    %974 = vmatpush.bf16.msra.mxu0 %v930
    %975 = vmatmul.bf16.gmra.mxu0 %v951
    %v976 = vpop.f32.mrf.mxu0
    %v977 = vadd.f32 0.0, %v976
    %v978 = vpop.f32.mrf.mxu0
    %v979 = vadd.f32 0.0, %v978
    %980 = vdwg.mxu0
    %981 = vmatpush.bf16.msra.mxu0 0
    %982 = vmatpush.bf16.msra.mxu0 0
    %983 = vmatpush.bf16.msra.mxu0 0
    %984 = vmatpush.bf16.msra.mxu0 %v943
    %985 = vmatpush.bf16.msra.mxu0 %v940
    %986 = vmatpush.bf16.msra.mxu0 %v937
    %987 = vmatpush.bf16.msra.mxu0 %v934
    %988 = vmatpush.bf16.msra.mxu0 %v931
    %989 = vmatmul.bf16.gmra.mxu0 %v951
    %v990 = vpop.f32.mrf.mxu0
    %v991 = vadd.f32 0.0, %v990
    %v992 = vpop.f32.mrf.mxu0
    %v993 = vadd.f32 0.0, %v992
    %994 = vdwg.mxu0
    %v995 = vstv %s72
    %v996 = vmul.f32 %v963, %v995
    %v997 = vmul.f32 %v977, %v995
    %v998 = vmul.f32 %v991, %v995
    %v999 = vmul.f32 %v965, %v995
    %v1000 = vmul.f32 %v979, %v995
    %v1001 = vmul.f32 %v993, %v995
    %1003 = vset.pattern.permute.xlu0 0
    %1004 = vperm.xlu0 %1003, %v775
    %v1005 = vpop.permute.xlu0 %1004
    %1008 = vset.pattern.permute.xlu0 0
    %1009 = vperm.xlu0 %1008, %v776
    %v1010 = vpop.permute.xlu0 %1009
    %v1012 = vadd.f32 %v996, %v1005
    %v1013 = vadd.f32 %v997, %v1005
    %v1014 = vadd.f32 %v998, %v1005
    %v1015 = vadd.f32 %v999, %v1010
    %v1016 = vadd.f32 %v1000, %v1010
    %v1017 = vadd.f32 %v1001, %v1010
    %v1018 = vxor.u32 %v1012, 2147483648
    %v1019 = vxor.u32 %v1013, 2147483648
    %v1020 = vxor.u32 %v1014, 2147483648
    %v1021 = vmul.f32 %v1018, 1.442695
    %v1022 = vpow.pop %v1021
    %v1023 = vmul.f32 %v1019, 1.442695
    %v1024 = vpow.pop %v1023
    %v1025 = vmul.f32 %v1020, 1.442695
    %v1026 = vpow.pop %v1025
    %v1027 = vadd.f32 %v1022, 1.0
    %v1028 = vadd.f32 %v1024, 1.0
    %v1029 = vadd.f32 %v1026, 1.0
    %v1030 = vrcp.pop %v1027
    %v1031 = vmul.f32 %v1027, %v1030
    %v1032 = vsub.f32 1.0, %v1031
    %v1033 = vmul.f32 %v1030, %v1032
    %v1034 = vadd.f32 %v1030, %v1033
    %vm1035 = vweird.f32 %v1027
    %vm1036 = vweird.f32 %v1030
    %vm1037 = vmor %vm1035, %vm1036
    %v1038 = vsel %vm1037, %v1030, %v1034
    %v1039 = vand.u32 2147483647, %v1027
    %vm1040 = vcmp.eq.f32.partialorder %v1039, 8.507059e+37
    %v1041 = vand.u32 %v1027, 2147483648
    %v1042 = vor.u32 1.1754944e-38, %v1041
    %v1043 = vsel %vm1040, %v1042, %v1038
    %v1044 = vmul.f32 1.0, %v1043
    %v1045 = vrcp.pop %v1028
    %v1046 = vmul.f32 %v1028, %v1045
    %v1047 = vsub.f32 1.0, %v1046
    %v1048 = vmul.f32 %v1045, %v1047
    %v1049 = vadd.f32 %v1045, %v1048
    %vm1050 = vweird.f32 %v1028
    %vm1051 = vweird.f32 %v1045
    %vm1052 = vmor %vm1050, %vm1051
    %v1053 = vsel %vm1052, %v1045, %v1049
    %v1054 = vand.u32 2147483647, %v1028
    %vm1055 = vcmp.eq.f32.partialorder %v1054, 8.507059e+37
    %v1056 = vand.u32 %v1028, 2147483648
    %v1057 = vor.u32 1.1754944e-38, %v1056
    %v1058 = vsel %vm1055, %v1057, %v1053
    %v1059 = vmul.f32 1.0, %v1058
    %v1060 = vrcp.pop %v1029
    %v1061 = vmul.f32 %v1029, %v1060
    %v1062 = vsub.f32 1.0, %v1061
    %v1063 = vmul.f32 %v1060, %v1062
    %v1064 = vadd.f32 %v1060, %v1063
    %vm1065 = vweird.f32 %v1029
    %vm1066 = vweird.f32 %v1060
    %vm1067 = vmor %vm1065, %vm1066
    %v1068 = vsel %vm1067, %v1060, %v1064
    %v1069 = vand.u32 2147483647, %v1029
    %vm1070 = vcmp.eq.f32.partialorder %v1069, 8.507059e+37
    %v1071 = vand.u32 %v1029, 2147483648
    %v1072 = vor.u32 1.1754944e-38, %v1071
    %v1073 = vsel %vm1070, %v1072, %v1068
    %v1074 = vmul.f32 1.0, %v1073
    %v1075 = vtanh.pop %v1015
    %v1076 = vtanh.pop %v1016
    %v1077 = vtanh.pop %v1017
    %v1078 = vmul.f32 %v1044, %v1075
    %v1079 = vmul.f32 %v1059, %v1076
    %v1080 = vmul.f32 %v1074, %v1077
    %v1081 = vld [vmem:[%s3] sm:$0x7]
    %v1083 = vperm.slane %v1081, 0
    %v1084 = vperm.slane %v1081, 1
    %v1085 = vperm.slane %v1081, 2
    %v1089 = vmul.f32 %v1078, %v1083
    %v1090 = vmul.f32 %v1079, %v1084
    %v1091 = vmul.f32 %v1080, %v1085
    %v1092 = vadd.f32 %v1089, %v1090
    %v1093 = vadd.f32 %v1092, %v1091
    %1094 = vst [vmem:[%s14] sm:$0xff] %v1093
    %1095 = vadd.xlane.f32.xlu0 %v346
    %v1096 = vpop.xlane.xlu0 %1095
    %v1097 = vmul.f32 %v346, %v346
    %1098 = vadd.xlane.f32.xlu0 %v1097
    %v1099 = vpop.xlane.xlu0 %1098
    %1100 = vadd.xlane.f32.xlu0 %v1093
    %v1101 = vpop.xlane.xlu0 %1100
    %v1102 = vmul.f32 %v1093, %v1093
    %1103 = vadd.xlane.f32.xlu0 %v1102
    %v1104 = vpop.xlane.xlu0 %1103
    %vm1105 = vcmask 7168
    %v1106 = vsel %vm1105, %v1096, %v1099
    %vm1107 = vcmask 15360
    %v1108 = vsel %vm1107, %v1106, %v1101
    %vm1109 = vcmask 23552
    %v1110 = vsel %vm1109, %v1108, %v1104
    %vm1111 = vcmask 31744
    %1112 = vst.msk [vmem:[%s15] sm:$0xff] %vm1111, %v1110
    // Predicated region
    $region58: #{edge_update.3} parent=1 // pred_check
      _
    $region59: #{edge_update.3} parent=1 // pred_check_branch
      %1114 = sbr.rel (0) target = $region61
    $region60: #{edge_update.3} parent=1 // pred_region
      _
    $region61: #{edge_update.3} parent=1 // pred_fallthru
      _
    // Predicated region
    $region62: #{edge_update.3} parent=1 // pred_check
      _
    $region63: #{edge_update.3} parent=1 // pred_check_branch
      %1116 = sbr.rel (0) target = $region65
    $region64: #{edge_update.3} parent=1 // pred_region
      _
    $region65: #{edge_update.3} parent=1 // pred_fallthru
      _
    // Predicated region
    $region66: #{edge_update.3} parent=1 // pred_check
      _
    $region67: #{edge_update.3} parent=1 // pred_check_branch
      %1118 = sbr.rel (0) target = $region69
    $region68: #{edge_update.3} parent=1 // pred_region
      _
    $region69: #{edge_update.3} parent=1 // pred_fallthru
      _
    // Predicated region
    $region70: #{edge_update.3} parent=1 // pred_check
      _
    $region71: #{edge_update.3} parent=1 // pred_check_branch
      %1120 = sbr.rel (0) target = $region73
    $region72: #{edge_update.3} parent=1 // pred_region
      _
    $region73: #{edge_update.3} parent=1 // pred_fallthru
      _
    // Predicated region
    $region74: #{edge_update.3} parent=1 // pred_check
      _
    $region75: #{edge_update.3} parent=1 // pred_check_branch
      %1122 = sbr.rel (0) target = $region77
    $region76: #{edge_update.3} parent=1 // pred_region
      _
    $region77: #{edge_update.3} parent=1 // pred_fallthru
      _
    // Predicated region
    $region78: #{edge_update.3} parent=1 // pred_check
      _
    $region79: #{edge_update.3} parent=1 // pred_check_branch
      %1124 = sbr.rel (0) target = $region81
    $region80: #{edge_update.3} parent=1 // pred_region
      _
    $region81: #{edge_update.3} parent=1 // pred_fallthru
      _
    %1125 = vsyncpa [#allocation3], 1

</llo_original>
